<compile_context>
chip_gen: v6e
topology: v6e:2x2x1
jax: 0.10.0
libtpu: 0.0.40
codegen_flags: <defaults>
</compile_context>

<pallas_src>
import functools

import jax
import jax.numpy as jnp
import numpy as np
from jax import lax
from jax.experimental import pallas as pl
from jax.experimental.pallas import tpu as pltpu


def _round_up(n, m):
    return ((n + m - 1) // m) * m


def _rnn_fused_kernel(x_ref, h0_ref, wx_ref, wh_ref, bh_ref, wo_ref, bo_ref,
                      y_ref, hout_ref, h_scr, xp_buf, h_buf,
                      *, t_chunk, seq_len, n_class):
    """One grid step == one chunk of `t_chunk` time steps (sequential grid)."""
    c = pl.program_id(0)

    # Carry the recurrent state across chunks in VMEM scratch.
    @pl.when(c == 0)
    def _():
        h_scr[...] = h0_ref[...]

    tc, bp, ip = x_ref.shape
    hp = h_scr.shape[-1]
    cp = y_ref.shape[-1]

    # (1) Input projection for the whole chunk: one well-shaped MXU matmul,
    #     hoisted out of the serial h -> tanh -> h dependency chain.
    #     (Leading-dim merge of an (8,128)-aligned tile: layout-preserving.)
    x2d = x_ref[...].reshape(tc * bp, ip)
    xp_buf[...] = (
        jnp.dot(x2d, wx_ref[...], preferred_element_type=jnp.float32)
        + bh_ref[...]
    ).reshape(tc, bp, hp)

    # (2) Serial recurrence. State lives in the fori_loop carry (vregs); only
    #     per-step work is h @ Wh + add + tanh. Wh is hoisted out of the loop.
    wh = wh_ref[...]

    def step(t, h):
        a = xp_buf[t] + jnp.dot(h, wh, preferred_element_type=jnp.float32)
        h_new = jnp.tanh(a)
        h_buf[t] = h_new
        return h_new

    h_init = h_scr[...]
    if seq_len % t_chunk == 0:
        # Static trip count; unroll short chunks for LLO scheduler visibility,
        # partially unroll long ones.
        unroll = True if t_chunk <= 32 else 4
        h_last = lax.fori_loop(0, t_chunk, step, h_init, unroll=unroll)
    else:
        # Ragged last chunk: run only the real steps so the carry ends on the
        # true final hidden state (padded-T rows of y are sliced off later).
        n_steps = jnp.minimum(seq_len - c * t_chunk, t_chunk)
        h_last = lax.fori_loop(0, n_steps, step, h_init)
    h_scr[...] = h_last

    # (3) Output projection + softmax/sigmoid, batched over the whole chunk
    #     (no recurrent dependency -> off the serial critical path).
    h2d = h_buf[...].reshape(tc * bp, hp)
    o = (jnp.dot(h2d, wo_ref[...], preferred_element_type=jnp.float32)
         + bo_ref[...])                                    # (tc*bp, cp)
    if n_class == 1:
        pred = jax.nn.sigmoid(o)
    else:
        # Padded class columns carry a -1e30 bias, so exp(...) == 0 and they
        # drop out of the softmax denominator automatically.
        o_max = jnp.max(o, axis=-1, keepdims=True)
        e = jnp.exp(o - o_max)
        denom = jnp.sum(e, axis=-1, keepdims=True)
        # Exact reciprocal: this is off the serial path and fully batched.
        pred = e * pl.reciprocal(denom, approx=False)
    y_ref[...] = pred.reshape(tc, bp, cp).astype(y_ref.dtype)

    # Final hidden state: write once, on the last chunk only (single writeback
    # at grid end thanks to the constant output index_map).
    @pl.when(c == pl.num_programs(0) - 1)
    def _():
        hout_ref[...] = h_scr[...].astype(hout_ref.dtype)


@jax.jit
def _compute_rnn_impl(x, pre_state, w_ih, b_ih, w_ho, b_ho):
    T, batch, in_feature = x.shape
    hidden_size = w_ih.shape[0]
    n_class = w_ho.shape[0]

    bp = _round_up(batch, 8)           # sublane-aligned batch
    ip = _round_up(in_feature, 128)    # lane-aligned input features
    hp = _round_up(hidden_size, 128)   # lane-aligned hidden
    cp = _round_up(n_class, 128)       # lane-dense predict_y store

    # Chunk the time axis; 128 steps of f32 (bp x ip/hp) stays well under the
    # v7x 64 MiB VMEM budget while amortizing per-grid-step overhead.
    t_chunk = min(T, 128)
    n_chunks = pl.cdiv(T, t_chunk)
    t_pad = n_chunks * t_chunk

    f32 = jnp.float32
    # Pre-transpose Linear weights to (in, out) and zero-pad to aligned tiles.
    # (Under jit this prep fuses/constant-folds; in a real model it would be
    # hoisted out of the hot path entirely.)
    wx = jnp.pad(w_ih[:, :in_feature].T.astype(f32),
                 ((0, ip - in_feature), (0, hp - hidden_size)))
    wh = jnp.pad(w_ih[:, in_feature:].T.astype(f32),
                 ((0, hp - hidden_size), (0, hp - hidden_size)))
    bh = jnp.pad(b_ih.astype(f32), (0, hp - hidden_size)).reshape(1, hp)
    wo = jnp.pad(w_ho.T.astype(f32),
                 ((0, hp - hidden_size), (0, cp - n_class)))
    # Padded class logits get a huge negative bias -> masked out of softmax.
    bo = jnp.pad(b_ho.astype(f32), (0, cp - n_class),
                 constant_values=-1e30).reshape(1, cp)

    x_p = jnp.pad(x.astype(f32), ((0, t_pad - T), (0, bp - batch),
                                  (0, ip - in_feature)))
    h0_p = jnp.pad(pre_state.astype(f32), ((0, bp - batch),
                                           (0, hp - hidden_size)))

    kernel = functools.partial(_rnn_fused_kernel, t_chunk=t_chunk,
                               seq_len=T, n_class=n_class)

    y_p, h_p = pl.pallas_call(
        kernel,
        out_shape=(
            jax.ShapeDtypeStruct((t_pad, bp, cp), f32),
            jax.ShapeDtypeStruct((bp, hp), f32),
        ),
        grid_spec=pltpu.PrefetchScalarGridSpec(
            num_scalar_prefetch=0,
            grid=(n_chunks,),
            in_specs=[
                pl.BlockSpec((t_chunk, bp, ip), lambda c: (c, 0, 0)),  # x chunk
                pl.BlockSpec((bp, hp), lambda c: (0, 0)),              # h0
                pl.BlockSpec((ip, hp), lambda c: (0, 0)),              # Wx
                pl.BlockSpec((hp, hp), lambda c: (0, 0)),              # Wh
                pl.BlockSpec((1, hp), lambda c: (0, 0)),               # b_ih
                pl.BlockSpec((hp, cp), lambda c: (0, 0)),              # Wo
                pl.BlockSpec((1, cp), lambda c: (0, 0)),               # b_ho
            ],
            out_specs=[
                pl.BlockSpec((t_chunk, bp, cp), lambda c: (c, 0, 0)),  # predict_y
                pl.BlockSpec((bp, hp), lambda c: (0, 0)),              # final hidden
            ],
            scratch_shapes=[
                pltpu.VMEM((bp, hp), f32),            # recurrent state carry
                pltpu.VMEM((t_chunk, bp, hp), f32),   # x_proj chunk
                pltpu.VMEM((t_chunk, bp, hp), f32),   # hidden-state chunk
            ],
        ),
        compiler_params=pltpu.CompilerParams(
            # The time recurrence is inherently serial -> sequential grid axis.
            # TODO(synk): on v7x, shard the (padded) batch axis across the two
            # TensorCores once batch is large enough to split per core.
            dimension_semantics=("arbitrary",),
        ),
    )(x_p, h0_p, wx, wh, bh, wo, bo)

    return y_p[:T, :batch, :n_class], h_p[:batch, :hidden_size]


def compute_rnn(x, pre_state, w_ih, b_ih, w_ho, b_ho):
    """Pallas implementation of computeRNN.forward.

    x         : (T, batch, in_feature) float32
    pre_state : (batch, hidden) float32 or None
    w_ih      : (hidden, in_feature + hidden)   -- PyTorch Linear weight layout
    b_ih      : (hidden,)
    w_ho      : (n_class, hidden)
    b_ho      : (n_class,)
    returns (predict_y (T, batch, n_class), hidden (batch, hidden))
    """
    if pre_state is None:
        pre_state = jnp.zeros((x.shape[1], w_ih.shape[0]), jnp.float32)
    return _compute_rnn_impl(x, pre_state, w_ih, b_ih, w_ho, b_ho)


def compute_rnn_ref(x, pre_state, w_ih, b_ih, w_ho, b_ho):
    """Pure-JAX reference mirroring the PyTorch loop."""
    T, batch, in_feature = x.shape
    hidden_size = w_ih.shape[0]
    n_class = w_ho.shape[0]
    if pre_state is None:
        pre_state = jnp.zeros((batch, hidden_size), jnp.float32)
    ys = []
    h = pre_state
    for t in range(T):
        tmp = jnp.concatenate([x[t], h], axis=1)
        a = tmp @ w_ih.T + b_ih
        h = jnp.tanh(a)
        o = h @ w_ho.T + b_ho
        if n_class == 1:
            ys.append(jax.nn.sigmoid(o))
        else:
            ys.append(jax.nn.softmax(o, axis=1))
    return jnp.stack(ys, axis=0), h


if __name__ == "__main__":
    # Small shapes consistent with the module's forward.
    T, batch, in_feature, hidden_size, n_class = 8, 2, 4, 32, 8

    key = jax.random.PRNGKey(0)
    k_x, k_h, k_w1, k_b1, k_w2, k_b2 = jax.random.split(key, 6)

    x = jax.random.normal(k_x, (T, batch, in_feature), dtype=jnp.float32)
    pre_state = jax.random.normal(k_h, (batch, hidden_size), dtype=jnp.float32)

    # Deterministic parameter init (uniform, roughly like PyTorch Linear init).
    fan_in1 = in_feature + hidden_size
    w_ih = jax.random.uniform(k_w1, (hidden_size, fan_in1), jnp.float32,
                              -1.0 / np.sqrt(fan_in1), 1.0 / np.sqrt(fan_in1))
    b_ih = jax.random.uniform(k_b1, (hidden_size,), jnp.float32,
                              -1.0 / np.sqrt(fan_in1), 1.0 / np.sqrt(fan_in1))
    w_ho = jax.random.uniform(k_w2, (n_class, hidden_size), jnp.float32,
                              -1.0 / np.sqrt(hidden_size), 1.0 / np.sqrt(hidden_size))
    b_ho = jax.random.uniform(k_b2, (n_class,), jnp.float32,
                              -1.0 / np.sqrt(hidden_size), 1.0 / np.sqrt(hidden_size))

    predict_y, hidden = compute_rnn(x, pre_state, w_ih, b_ih, w_ho, b_ho)
    jax.block_until_ready((predict_y, hidden))

    ref_y, ref_h = compute_rnn_ref(x, pre_state, w_ih, b_ih, w_ho, b_ho)
    np.testing.assert_allclose(np.asarray(predict_y), np.asarray(ref_y),
                               rtol=1e-5, atol=1e-5)
    np.testing.assert_allclose(np.asarray(hidden), np.asarray(ref_h),
                               rtol=1e-5, atol=1e-5)

    print("KERNEL_OK")
</pallas_src>

<mosaic_0001>
module attributes {stable_mosaic.version = 11 : i64} {
  func.func @_rnn_fused_kernel(%arg0: i32, %arg1: memref<8x8x128xf32, #tpu.memory_space<vmem>>, %arg2: memref<8x128xf32, #tpu.memory_space<vmem>>, %arg3: memref<128x128xf32, #tpu.memory_space<vmem>>, %arg4: memref<128x128xf32, #tpu.memory_space<vmem>>, %arg5: memref<1x128xf32, #tpu.memory_space<vmem>>, %arg6: memref<128x128xf32, #tpu.memory_space<vmem>>, %arg7: memref<1x128xf32, #tpu.memory_space<vmem>>, %arg8: memref<8x8x128xf32, #tpu.memory_space<vmem>>, %arg9: memref<8x128xf32, #tpu.memory_space<vmem>>, %arg10: memref<8x128xf32, #tpu.memory_space<vmem>>, %arg11: memref<8x8x128xf32, #tpu.memory_space<vmem>>, %arg12: memref<8x8x128xf32, #tpu.memory_space<vmem>>) attributes {dimension_semantics = [#tpu.dimension_semantics<arbitrary>], iteration_bounds = array<i64: 1>, scalar_prefetch = 0 : i64, scratch_operands = 3 : i64, tpu.core_type = #tpu.core_type<tc>, window_params = [{transform_indices = @transform_0, window_bounds = array<i64: 8, 8, 128>}, {pipeline_mode = #tpu.pipeline_mode<synchronous>, transform_indices = @transform_1, window_bounds = array<i64: 8, 128>}, {pipeline_mode = #tpu.pipeline_mode<synchronous>, transform_indices = @transform_2, window_bounds = array<i64: 128, 128>}, {pipeline_mode = #tpu.pipeline_mode<synchronous>, transform_indices = @transform_3, window_bounds = array<i64: 128, 128>}, {pipeline_mode = #tpu.pipeline_mode<synchronous>, transform_indices = @transform_4, window_bounds = array<i64: 1, 128>}, {pipeline_mode = #tpu.pipeline_mode<synchronous>, transform_indices = @transform_5, window_bounds = array<i64: 128, 128>}, {pipeline_mode = #tpu.pipeline_mode<synchronous>, transform_indices = @transform_6, window_bounds = array<i64: 1, 128>}, {transform_indices = @transform_7, window_bounds = array<i64: 8, 8, 128>}, {pipeline_mode = #tpu.pipeline_mode<synchronous>, transform_indices = @transform_8, window_bounds = array<i64: 8, 128>}]} {
    %c0_i32 = arith.constant 0 : i32
    %0 = arith.cmpi eq, %arg0, %c0_i32 : i32
    %1 = arith.extui %0 : i1 to i32
    %c0_i32_0 = arith.constant 0 : i32
    %2 = arith.cmpi ne, %1, %c0_i32_0 : i32
    scf.if %2 {
      %c0_72 = arith.constant 0 : index
      %c0_73 = arith.constant 0 : index
      %117 = vector.load %arg2[%c0_72, %c0_73] : memref<8x128xf32, #tpu.memory_space<vmem>>, vector<8x128xf32>
      %c0_74 = arith.constant 0 : index
      %c0_75 = arith.constant 0 : index
      %118 = vector.load %arg10[%c0_74, %c0_75] : memref<8x128xf32, #tpu.memory_space<vmem>>, vector<8x128xf32>
      tpu.vector_store %arg10[%c0_74, %c0_75], %117 {strides = array<i32>} : memref<8x128xf32, #tpu.memory_space<vmem>>, vector<8x128xf32>,
    } else {
    }
    %c0 = arith.constant 0 : index
    %c0_1 = arith.constant 0 : index
    %c0_2 = arith.constant 0 : index
    %3 = vector.load %arg1[%c0, %c0_1, %c0_2] : memref<8x8x128xf32, #tpu.memory_space<vmem>>, vector<8x8x128xf32>
    %4 = vector.shape_cast %3 : vector<8x8x128xf32> to vector<64x128xf32>
    %c0_3 = arith.constant 0 : index
    %c0_4 = arith.constant 0 : index
    %5 = vector.load %arg3[%c0_3, %c0_4] : memref<128x128xf32, #tpu.memory_space<vmem>>, vector<128x128xf32>
    %cst = arith.constant dense<0.000000e+00> : vector<64x128xf32>
    %6 = tpu.matmul %4, %5, %cst {dimension_numbers = #tpu.dot_dimension_numbers<[1], [0], [0], [1], [0, 0, 1, 1], [], []>} : vector<64x128xf32>, vector<128x128xf32>, vector<64x128xf32> -> vector<64x128xf32>
    %c0_5 = arith.constant 0 : index
    %c0_6 = arith.constant 0 : index
    %7 = vector.load %arg5[%c0_5, %c0_6] : memref<1x128xf32, #tpu.memory_space<vmem>>, vector<1x128xf32>
    %8 = vector.broadcast %7 : vector<1x128xf32> to vector<64x128xf32>
    %9 = arith.addf %6, %8 : vector<64x128xf32>
    %10 = vector.shape_cast %9 : vector<64x128xf32> to vector<8x8x128xf32>
    %c0_7 = arith.constant 0 : index
    %c0_8 = arith.constant 0 : index
    %c0_9 = arith.constant 0 : index
    %11 = vector.load %arg11[%c0_7, %c0_8, %c0_9] : memref<8x8x128xf32, #tpu.memory_space<vmem>>, vector<8x8x128xf32>
    tpu.vector_store %arg11[%c0_7, %c0_8, %c0_9], %10 {strides = array<i32>} : memref<8x8x128xf32, #tpu.memory_space<vmem>>, vector<8x8x128xf32>,
    %c0_10 = arith.constant 0 : index
    %c0_11 = arith.constant 0 : index
    %12 = vector.load %arg4[%c0_10, %c0_11] : memref<128x128xf32, #tpu.memory_space<vmem>>, vector<128x128xf32>
    %c0_12 = arith.constant 0 : index
    %c0_13 = arith.constant 0 : index
    %13 = vector.load %arg10[%c0_12, %c0_13] : memref<8x128xf32, #tpu.memory_space<vmem>>, vector<8x128xf32>
    %c0_i32_14 = arith.constant 0 : i32
    %14 = arith.index_cast %c0_i32_14 : i32 to index
    %c0_15 = arith.constant 0 : index
    %c0_16 = arith.constant 0 : index
    %15 = vector.load %arg11[%14, %c0_15, %c0_16] : memref<8x8x128xf32, #tpu.memory_space<vmem>>, vector<1x8x128xf32>
    %16 = vector.shape_cast %15 : vector<1x8x128xf32> to vector<8x128xf32>
    %cst_17 = arith.constant dense<0.000000e+00> : vector<8x128xf32>
    %17 = tpu.matmul %13, %12, %cst_17 {dimension_numbers = #tpu.dot_dimension_numbers<[1], [0], [0], [1], [0, 0, 1, 1], [], []>} : vector<8x128xf32>, vector<128x128xf32>, vector<8x128xf32> -> vector<8x128xf32>
    %18 = arith.addf %16, %17 : vector<8x128xf32>
    %19 = math.tanh %18 : vector<8x128xf32>
    %20 = arith.index_cast %c0_i32_14 : i32 to index
    %c0_18 = arith.constant 0 : index
    %c0_19 = arith.constant 0 : index
    %21 = vector.load %arg12[%20, %c0_18, %c0_19] : memref<8x8x128xf32, #tpu.memory_space<vmem>>, vector<1x8x128xf32>
    %22 = vector.shape_cast %21 : vector<1x8x128xf32> to vector<8x128xf32>
    %23 = vector.shape_cast %19 : vector<8x128xf32> to vector<1x8x128xf32>
    tpu.vector_store %arg12[%20, %c0_18, %c0_19], %23 {strides = array<i32>} : memref<8x8x128xf32, #tpu.memory_space<vmem>>, vector<1x8x128xf32>,
    %c1_i32 = arith.constant 1 : i32
    %24 = arith.index_cast %c1_i32 : i32 to index
    %c0_20 = arith.constant 0 : index
    %c0_21 = arith.constant 0 : index
    %25 = vector.load %arg11[%24, %c0_20, %c0_21] : memref<8x8x128xf32, #tpu.memory_space<vmem>>, vector<1x8x128xf32>
    %26 = vector.shape_cast %25 : vector<1x8x128xf32> to vector<8x128xf32>
    %cst_22 = arith.constant dense<0.000000e+00> : vector<8x128xf32>
    %27 = tpu.matmul %19, %12, %cst_22 {dimension_numbers = #tpu.dot_dimension_numbers<[1], [0], [0], [1], [0, 0, 1, 1], [], []>} : vector<8x128xf32>, vector<128x128xf32>, vector<8x128xf32> -> vector<8x128xf32>
    %28 = arith.addf %26, %27 : vector<8x128xf32>
    %29 = math.tanh %28 : vector<8x128xf32>
    %30 = arith.index_cast %c1_i32 : i32 to index
    %c0_23 = arith.constant 0 : index
    %c0_24 = arith.constant 0 : index
    %31 = vector.load %arg12[%30, %c0_23, %c0_24] : memref<8x8x128xf32, #tpu.memory_space<vmem>>, vector<1x8x128xf32>
    %32 = vector.shape_cast %31 : vector<1x8x128xf32> to vector<8x128xf32>
    %33 = vector.shape_cast %29 : vector<8x128xf32> to vector<1x8x128xf32>
    tpu.vector_store %arg12[%30, %c0_23, %c0_24], %33 {strides = array<i32>} : memref<8x8x128xf32, #tpu.memory_space<vmem>>, vector<1x8x128xf32>,
    %c2_i32 = arith.constant 2 : i32
    %34 = arith.index_cast %c2_i32 : i32 to index
    %c0_25 = arith.constant 0 : index
    %c0_26 = arith.constant 0 : index
    %35 = vector.load %arg11[%34, %c0_25, %c0_26] : memref<8x8x128xf32, #tpu.memory_space<vmem>>, vector<1x8x128xf32>
    %36 = vector.shape_cast %35 : vector<1x8x128xf32> to vector<8x128xf32>
    %cst_27 = arith.constant dense<0.000000e+00> : vector<8x128xf32>
    %37 = tpu.matmul %29, %12, %cst_27 {dimension_numbers = #tpu.dot_dimension_numbers<[1], [0], [0], [1], [0, 0, 1, 1], [], []>} : vector<8x128xf32>, vector<128x128xf32>, vector<8x128xf32> -> vector<8x128xf32>
    %38 = arith.addf %36, %37 : vector<8x128xf32>
    %39 = math.tanh %38 : vector<8x128xf32>
    %40 = arith.index_cast %c2_i32 : i32 to index
    %c0_28 = arith.constant 0 : index
    %c0_29 = arith.constant 0 : index
    %41 = vector.load %arg12[%40, %c0_28, %c0_29] : memref<8x8x128xf32, #tpu.memory_space<vmem>>, vector<1x8x128xf32>
    %42 = vector.shape_cast %41 : vector<1x8x128xf32> to vector<8x128xf32>
    %43 = vector.shape_cast %39 : vector<8x128xf32> to vector<1x8x128xf32>
    tpu.vector_store %arg12[%40, %c0_28, %c0_29], %43 {strides = array<i32>} : memref<8x8x128xf32, #tpu.memory_space<vmem>>, vector<1x8x128xf32>,
    %c3_i32 = arith.constant 3 : i32
    %44 = arith.index_cast %c3_i32 : i32 to index
    %c0_30 = arith.constant 0 : index
    %c0_31 = arith.constant 0 : index
    %45 = vector.load %arg11[%44, %c0_30, %c0_31] : memref<8x8x128xf32, #tpu.memory_space<vmem>>, vector<1x8x128xf32>
    %46 = vector.shape_cast %45 : vector<1x8x128xf32> to vector<8x128xf32>
    %cst_32 = arith.constant dense<0.000000e+00> : vector<8x128xf32>
    %47 = tpu.matmul %39, %12, %cst_32 {dimension_numbers = #tpu.dot_dimension_numbers<[1], [0], [0], [1], [0, 0, 1, 1], [], []>} : vector<8x128xf32>, vector<128x128xf32>, vector<8x128xf32> -> vector<8x128xf32>
    %48 = arith.addf %46, %47 : vector<8x128xf32>
    %49 = math.tanh %48 : vector<8x128xf32>
    %50 = arith.index_cast %c3_i32 : i32 to index
    %c0_33 = arith.constant 0 : index
    %c0_34 = arith.constant 0 : index
    %51 = vector.load %arg12[%50, %c0_33, %c0_34] : memref<8x8x128xf32, #tpu.memory_space<vmem>>, vector<1x8x128xf32>
    %52 = vector.shape_cast %51 : vector<1x8x128xf32> to vector<8x128xf32>
    %53 = vector.shape_cast %49 : vector<8x128xf32> to vector<1x8x128xf32>
    tpu.vector_store %arg12[%50, %c0_33, %c0_34], %53 {strides = array<i32>} : memref<8x8x128xf32, #tpu.memory_space<vmem>>, vector<1x8x128xf32>,
    %c4_i32 = arith.constant 4 : i32
    %54 = arith.index_cast %c4_i32 : i32 to index
    %c0_35 = arith.constant 0 : index
    %c0_36 = arith.constant 0 : index
    %55 = vector.load %arg11[%54, %c0_35, %c0_36] : memref<8x8x128xf32, #tpu.memory_space<vmem>>, vector<1x8x128xf32>
    %56 = vector.shape_cast %55 : vector<1x8x128xf32> to vector<8x128xf32>
    %cst_37 = arith.constant dense<0.000000e+00> : vector<8x128xf32>
    %57 = tpu.matmul %49, %12, %cst_37 {dimension_numbers = #tpu.dot_dimension_numbers<[1], [0], [0], [1], [0, 0, 1, 1], [], []>} : vector<8x128xf32>, vector<128x128xf32>, vector<8x128xf32> -> vector<8x128xf32>
    %58 = arith.addf %56, %57 : vector<8x128xf32>
    %59 = math.tanh %58 : vector<8x128xf32>
    %60 = arith.index_cast %c4_i32 : i32 to index
    %c0_38 = arith.constant 0 : index
    %c0_39 = arith.constant 0 : index
    %61 = vector.load %arg12[%60, %c0_38, %c0_39] : memref<8x8x128xf32, #tpu.memory_space<vmem>>, vector<1x8x128xf32>
    %62 = vector.shape_cast %61 : vector<1x8x128xf32> to vector<8x128xf32>
    %63 = vector.shape_cast %59 : vector<8x128xf32> to vector<1x8x128xf32>
    tpu.vector_store %arg12[%60, %c0_38, %c0_39], %63 {strides = array<i32>} : memref<8x8x128xf32, #tpu.memory_space<vmem>>, vector<1x8x128xf32>,
    %c5_i32 = arith.constant 5 : i32
    %64 = arith.index_cast %c5_i32 : i32 to index
    %c0_40 = arith.constant 0 : index
    %c0_41 = arith.constant 0 : index
    %65 = vector.load %arg11[%64, %c0_40, %c0_41] : memref<8x8x128xf32, #tpu.memory_space<vmem>>, vector<1x8x128xf32>
    %66 = vector.shape_cast %65 : vector<1x8x128xf32> to vector<8x128xf32>
    %cst_42 = arith.constant dense<0.000000e+00> : vector<8x128xf32>
    %67 = tpu.matmul %59, %12, %cst_42 {dimension_numbers = #tpu.dot_dimension_numbers<[1], [0], [0], [1], [0, 0, 1, 1], [], []>} : vector<8x128xf32>, vector<128x128xf32>, vector<8x128xf32> -> vector<8x128xf32>
    %68 = arith.addf %66, %67 : vector<8x128xf32>
    %69 = math.tanh %68 : vector<8x128xf32>
    %70 = arith.index_cast %c5_i32 : i32 to index
    %c0_43 = arith.constant 0 : index
    %c0_44 = arith.constant 0 : index
    %71 = vector.load %arg12[%70, %c0_43, %c0_44] : memref<8x8x128xf32, #tpu.memory_space<vmem>>, vector<1x8x128xf32>
    %72 = vector.shape_cast %71 : vector<1x8x128xf32> to vector<8x128xf32>
    %73 = vector.shape_cast %69 : vector<8x128xf32> to vector<1x8x128xf32>
    tpu.vector_store %arg12[%70, %c0_43, %c0_44], %73 {strides = array<i32>} : memref<8x8x128xf32, #tpu.memory_space<vmem>>, vector<1x8x128xf32>,
    %c6_i32 = arith.constant 6 : i32
    %74 = arith.index_cast %c6_i32 : i32 to index
    %c0_45 = arith.constant 0 : index
    %c0_46 = arith.constant 0 : index
    %75 = vector.load %arg11[%74, %c0_45, %c0_46] : memref<8x8x128xf32, #tpu.memory_space<vmem>>, vector<1x8x128xf32>
    %76 = vector.shape_cast %75 : vector<1x8x128xf32> to vector<8x128xf32>
    %cst_47 = arith.constant dense<0.000000e+00> : vector<8x128xf32>
    %77 = tpu.matmul %69, %12, %cst_47 {dimension_numbers = #tpu.dot_dimension_numbers<[1], [0], [0], [1], [0, 0, 1, 1], [], []>} : vector<8x128xf32>, vector<128x128xf32>, vector<8x128xf32> -> vector<8x128xf32>
    %78 = arith.addf %76, %77 : vector<8x128xf32>
    %79 = math.tanh %78 : vector<8x128xf32>
    %80 = arith.index_cast %c6_i32 : i32 to index
    %c0_48 = arith.constant 0 : index
    %c0_49 = arith.constant 0 : index
    %81 = vector.load %arg12[%80, %c0_48, %c0_49] : memref<8x8x128xf32, #tpu.memory_space<vmem>>, vector<1x8x128xf32>
    %82 = vector.shape_cast %81 : vector<1x8x128xf32> to vector<8x128xf32>
    %83 = vector.shape_cast %79 : vector<8x128xf32> to vector<1x8x128xf32>
    tpu.vector_store %arg12[%80, %c0_48, %c0_49], %83 {strides = array<i32>} : memref<8x8x128xf32, #tpu.memory_space<vmem>>, vector<1x8x128xf32>,
    %c7_i32 = arith.constant 7 : i32
    %84 = arith.index_cast %c7_i32 : i32 to index
    %c0_50 = arith.constant 0 : index
    %c0_51 = arith.constant 0 : index
    %85 = vector.load %arg11[%84, %c0_50, %c0_51] : memref<8x8x128xf32, #tpu.memory_space<vmem>>, vector<1x8x128xf32>
    %86 = vector.shape_cast %85 : vector<1x8x128xf32> to vector<8x128xf32>
    %cst_52 = arith.constant dense<0.000000e+00> : vector<8x128xf32>
    %87 = tpu.matmul %79, %12, %cst_52 {dimension_numbers = #tpu.dot_dimension_numbers<[1], [0], [0], [1], [0, 0, 1, 1], [], []>} : vector<8x128xf32>, vector<128x128xf32>, vector<8x128xf32> -> vector<8x128xf32>
    %88 = arith.addf %86, %87 : vector<8x128xf32>
    %89 = math.tanh %88 : vector<8x128xf32>
    %90 = arith.index_cast %c7_i32 : i32 to index
    %c0_53 = arith.constant 0 : index
    %c0_54 = arith.constant 0 : index
    %91 = vector.load %arg12[%90, %c0_53, %c0_54] : memref<8x8x128xf32, #tpu.memory_space<vmem>>, vector<1x8x128xf32>
    %92 = vector.shape_cast %91 : vector<1x8x128xf32> to vector<8x128xf32>
    %93 = vector.shape_cast %89 : vector<8x128xf32> to vector<1x8x128xf32>
    tpu.vector_store %arg12[%90, %c0_53, %c0_54], %93 {strides = array<i32>} : memref<8x8x128xf32, #tpu.memory_space<vmem>>, vector<1x8x128xf32>,
    %c8_i32 = arith.constant 8 : i32
    %c0_55 = arith.constant 0 : index
    %c0_56 = arith.constant 0 : index
    %94 = vector.load %arg10[%c0_55, %c0_56] : memref<8x128xf32, #tpu.memory_space<vmem>>, vector<8x128xf32>
    tpu.vector_store %arg10[%c0_55, %c0_56], %89 {strides = array<i32>} : memref<8x128xf32, #tpu.memory_space<vmem>>, vector<8x128xf32>,
    %c0_57 = arith.constant 0 : index
    %c0_58 = arith.constant 0 : index
    %c0_59 = arith.constant 0 : index
    %95 = vector.load %arg12[%c0_57, %c0_58, %c0_59] : memref<8x8x128xf32, #tpu.memory_space<vmem>>, vector<8x8x128xf32>
    %96 = vector.shape_cast %95 : vector<8x8x128xf32> to vector<64x128xf32>
    %c0_60 = arith.constant 0 : index
    %c0_61 = arith.constant 0 : index
    %97 = vector.load %arg6[%c0_60, %c0_61] : memref<128x128xf32, #tpu.memory_space<vmem>>, vector<128x128xf32>
    %cst_62 = arith.constant dense<0.000000e+00> : vector<64x128xf32>
    %98 = tpu.matmul %96, %97, %cst_62 {dimension_numbers = #tpu.dot_dimension_numbers<[1], [0], [0], [1], [0, 0, 1, 1], [], []>} : vector<64x128xf32>, vector<128x128xf32>, vector<64x128xf32> -> vector<64x128xf32>
    %c0_63 = arith.constant 0 : index
    %c0_64 = arith.constant 0 : index
    %99 = vector.load %arg7[%c0_63, %c0_64] : memref<1x128xf32, #tpu.memory_space<vmem>>, vector<1x128xf32>
    %100 = vector.broadcast %99 : vector<1x128xf32> to vector<64x128xf32>
    %101 = arith.addf %98, %100 : vector<64x128xf32>
    %cst_65 = arith.constant dense<0xFF800000> : vector<64xf32>
    %102 = vector.multi_reduction <maximumf>, %101, %cst_65 [1] : vector<64x128xf32> to vector<64xf32>
    %103 = vector.shape_cast %102 : vector<64xf32> to vector<64x1xf32>
    %104 = vector.broadcast %103 : vector<64x1xf32> to vector<64x128xf32>
    %105 = arith.subf %101, %104 : vector<64x128xf32>
    %106 = math.exp %105 : vector<64x128xf32>
    %cst_66 = arith.constant dense<0.000000e+00> : vector<64xf32>
    %107 = vector.multi_reduction <add>, %106, %cst_66 [1] : vector<64x128xf32> to vector<64xf32>
    %108 = vector.shape_cast %107 : vector<64xf32> to vector<64x1xf32>
    %109 = tpu.reciprocal %108 : vector<64x1xf32> -> vector<64x1xf32>
    %110 = vector.broadcast %109 : vector<64x1xf32> to vector<64x128xf32>
    %111 = arith.mulf %106, %110 : vector<64x128xf32>
    %112 = vector.shape_cast %111 : vector<64x128xf32> to vector<8x8x128xf32>
    %c0_67 = arith.constant 0 : index
    %c0_68 = arith.constant 0 : index
    %c0_69 = arith.constant 0 : index
    %113 = vector.load %arg8[%c0_67, %c0_68, %c0_69] : memref<8x8x128xf32, #tpu.memory_space<vmem>>, vector<8x8x128xf32>
    tpu.vector_store %arg8[%c0_67, %c0_68, %c0_69], %112 {strides = array<i32>} : memref<8x8x128xf32, #tpu.memory_space<vmem>>, vector<8x8x128xf32>,
    %c0_i32_70 = arith.constant 0 : i32
    %114 = arith.cmpi eq, %arg0, %c0_i32_70 : i32
    %115 = arith.extui %114 : i1 to i32
    %c0_i32_71 = arith.constant 0 : i32
    %116 = arith.cmpi ne, %115, %c0_i32_71 : i32
    scf.if %116 {
      %c0_72 = arith.constant 0 : index
      %c0_73 = arith.constant 0 : index
      %117 = vector.load %arg10[%c0_72, %c0_73] : memref<8x128xf32, #tpu.memory_space<vmem>>, vector<8x128xf32>
      %c0_74 = arith.constant 0 : index
      %c0_75 = arith.constant 0 : index
      %118 = vector.load %arg9[%c0_74, %c0_75] : memref<8x128xf32, #tpu.memory_space<vmem>>, vector<8x128xf32>
      tpu.vector_store %arg9[%c0_74, %c0_75], %117 {strides = array<i32>} : memref<8x128xf32, #tpu.memory_space<vmem>>, vector<8x128xf32>,
    } else {
    }
    return
  }
  func.func @transform_0(%arg0: i32) -> (i32, i32, i32) {
    %c0_i32 = arith.constant 0 : i32
    %c0_i32_0 = arith.constant 0 : i32
    %c0_i32_1 = arith.constant 0 : i32
    return %arg0, %c0_i32, %c0_i32_0 : i32, i32, i32
  }
  func.func @transform_1(%arg0: i32) -> (i32, i32) {
    %c0_i32 = arith.constant 0 : i32
    %c0_i32_0 = arith.constant 0 : i32
    %c0_i32_1 = arith.constant 0 : i32
    return %c0_i32, %c0_i32_0 : i32, i32
  }
  func.func @transform_2(%arg0: i32) -> (i32, i32) {
    %c0_i32 = arith.constant 0 : i32
    %c0_i32_0 = arith.constant 0 : i32
    %c0_i32_1 = arith.constant 0 : i32
    return %c0_i32, %c0_i32_0 : i32, i32
  }
  func.func @transform_3(%arg0: i32) -> (i32, i32) {
    %c0_i32 = arith.constant 0 : i32
    %c0_i32_0 = arith.constant 0 : i32
    %c0_i32_1 = arith.constant 0 : i32
    return %c0_i32, %c0_i32_0 : i32, i32
  }
  func.func @transform_4(%arg0: i32) -> (i32, i32) {
    %c0_i32 = arith.constant 0 : i32
    %c0_i32_0 = arith.constant 0 : i32
    %c0_i32_1 = arith.constant 0 : i32
    return %c0_i32, %c0_i32_0 : i32, i32
  }
  func.func @transform_5(%arg0: i32) -> (i32, i32) {
    %c0_i32 = arith.constant 0 : i32
    %c0_i32_0 = arith.constant 0 : i32
    %c0_i32_1 = arith.constant 0 : i32
    return %c0_i32, %c0_i32_0 : i32, i32
  }
  func.func @transform_6(%arg0: i32) -> (i32, i32) {
    %c0_i32 = arith.constant 0 : i32
    %c0_i32_0 = arith.constant 0 : i32
    %c0_i32_1 = arith.constant 0 : i32
    return %c0_i32, %c0_i32_0 : i32, i32
  }
  func.func @transform_7(%arg0: i32) -> (i32, i32, i32) {
    %c0_i32 = arith.constant 0 : i32
    %c0_i32_0 = arith.constant 0 : i32
    %c0_i32_1 = arith.constant 0 : i32
    return %arg0, %c0_i32, %c0_i32_0 : i32, i32, i32
  }
  func.func @transform_8(%arg0: i32) -> (i32, i32) {
    %c0_i32 = arith.constant 0 : i32
    %c0_i32_0 = arith.constant 0 : i32
    %c0_i32_1 = arith.constant 0 : i32
    return %c0_i32, %c0_i32_0 : i32, i32
  }
}

</mosaic_0001>

<llo_original>
// kernel: _compute_rnn_impl.1
$region0: #{_compute_rnn_impl.1}
  #allocation0 [shape = 'u32[]', space=smem, size = 0x4, offset = 0x4, fixed_abs, tag = 'smem constant byte address 0x4 - core index']
  #allocation1 [shape = 'u32[144,128]{1,0:T(1,128)}', space=vmem, size = 0x12000, scoped, tag = 'internal scratch']
  #allocation2 [shape = 'f32[8,128]{1,0:T(8,128)}', space=vmem, size = 0x1000, scoped, tag = 'scratch operand']
  #allocation3 [shape = 'f32[8,8,128]{2,1,0:T(8,128)}', space=vmem, size = 0x8000, scoped, tag = 'scratch operand']
  #allocation4 [shape = 'f32[8,8,128]{2,1,0:T(8,128)}', space=vmem, size = 0x8000, scoped, tag = 'scratch operand']
  %s0 = inlined_call_operand.vmem [shape: f32[8,8,128], index: 0, kind: input, shape index: {}]
  %s1 = inlined_call_operand.vmem [shape: f32[8,128], index: 1, kind: input, shape index: {}]
  %s2 = inlined_call_operand.vmem [shape: f32[128,128], index: 2, kind: input, shape index: {}]
  %s3 = inlined_call_operand.vmem [shape: f32[128,128], index: 3, kind: input, shape index: {}]
  %s4 = inlined_call_operand.vmem [shape: f32[1,128], index: 4, kind: input, shape index: {}]
  %s5 = inlined_call_operand.vmem [shape: f32[128,128], index: 5, kind: input, shape index: {}]
  %s6 = inlined_call_operand.vmem [shape: f32[1,128], index: 6, kind: input, shape index: {}]
  %s7 = inlined_call_operand.vmem [shape: f32[8,8,128], index: 7, kind: output, shape index: {0}]
  %s8 = inlined_call_operand.vmem [shape: f32[8,128], index: 8, kind: output, shape index: {1}]
  %9 = xla_tuple %s7, %s8
  %s10 = sld [smem:[#allocation0]]
  $region54: #{_compute_rnn_impl.1} parent=0
    _
  %s12 = ssub.s32 1, %s10
  %s13 = scalar_select 0, %s12, %s10
  // Predicated region
  $region2: #{_compute_rnn_impl.1} parent=0 // pred_check
    _
  $region3: #{_compute_rnn_impl.1} parent=0 // pred_check_branch
    %15 = sbr.rel (0) target = $region5
  $region4: #{_compute_rnn_impl.1} parent=0 // pred_region
    _
  $region5: #{_compute_rnn_impl.1} parent=0 // pred_fallthru
    _
  // Predicated region
  $region6: #{_compute_rnn_impl.1} parent=0 // pred_check
    _
  $region7: #{_compute_rnn_impl.1} parent=0 // pred_check_branch
    %17 = sbr.rel (0) target = $region9
  $region8: #{_compute_rnn_impl.1} parent=0 // pred_region
    _
  $region9: #{_compute_rnn_impl.1} parent=0 // pred_fallthru
    _
  // Predicated region
  $region10: #{_compute_rnn_impl.1} parent=0 // pred_check
    _
  $region11: #{_compute_rnn_impl.1} parent=0 // pred_check_branch
    %19 = sbr.rel (0) target = $region13
  $region12: #{_compute_rnn_impl.1} parent=0 // pred_region
    _
  $region13: #{_compute_rnn_impl.1} parent=0 // pred_fallthru
    _
  // Predicated region
  $region14: #{_compute_rnn_impl.1} parent=0 // pred_check
    _
  $region15: #{_compute_rnn_impl.1} parent=0 // pred_check_branch
    %21 = sbr.rel (0) target = $region17
  $region16: #{_compute_rnn_impl.1} parent=0 // pred_region
    _
  $region17: #{_compute_rnn_impl.1} parent=0 // pred_fallthru
    _
  // Predicated region
  $region18: #{_compute_rnn_impl.1} parent=0 // pred_check
    _
  $region19: #{_compute_rnn_impl.1} parent=0 // pred_check_branch
    %23 = sbr.rel (0) target = $region21
  $region20: #{_compute_rnn_impl.1} parent=0 // pred_region
    _
  $region21: #{_compute_rnn_impl.1} parent=0 // pred_fallthru
    _
  // Predicated region
  $region22: #{_compute_rnn_impl.1} parent=0 // pred_check
    _
  $region23: #{_compute_rnn_impl.1} parent=0 // pred_check_branch
    %25 = sbr.rel (0) target = $region25
  $region24: #{_compute_rnn_impl.1} parent=0 // pred_region
    _
  $region25: #{_compute_rnn_impl.1} parent=0 // pred_fallthru
    _
  // Predicated region
  $region26: #{_compute_rnn_impl.1} parent=0 // pred_check
    _
  $region27: #{_compute_rnn_impl.1} parent=0 // pred_check_branch
    %27 = sbr.rel (0) target = $region29
  $region28: #{_compute_rnn_impl.1} parent=0 // pred_region
    _
  $region29: #{_compute_rnn_impl.1} parent=0 // pred_fallthru
    _
  %p28 = scmp.eq.s32.totalorder 0, 0
  // Predicated region
  $region30: #{_compute_rnn_impl.1} parent=0 // pred_check
    %p29 = pneg %p28
  $region31: #{_compute_rnn_impl.1} parent=0 // pred_check_branch
    %31 = sbr.rel (%p29) target = $region33
  $region32: #{_compute_rnn_impl.1} parent=0 // pred_region
    %v32 = vld [vmem:[%s1] sm:$0xff]
    %33 = vst [vmem:[#allocation2] sm:$0xff] %v32
  $region33: #{_compute_rnn_impl.1} parent=0 // pred_fallthru
    _
  %v34 = vld [vmem:[%s0] sm:$0xff]
  %v35 = vld [vmem:[%s0 + $0x8] sm:$0xff]
  %v36 = vld [vmem:[%s0 + $0x10] sm:$0xff]
  %v37 = vld [vmem:[%s0 + $0x18] sm:$0xff]
  %v38 = vld [vmem:[%s0 + $0x20] sm:$0xff]
  %v39 = vld [vmem:[%s0 + $0x28] sm:$0xff]
  %v40 = vld [vmem:[%s0 + $0x30] sm:$0xff]
  %v41 = vld [vmem:[%s0 + $0x38] sm:$0xff]
  %v42 = vld [vmem:[%s2] sm:$0xff]
  %v43 = vld [vmem:[%s2 + $0x8] sm:$0xff]
  %v44 = vld [vmem:[%s2 + $0x10] sm:$0xff]
  %v45 = vld [vmem:[%s2 + $0x18] sm:$0xff]
  %v46 = vld [vmem:[%s2 + $0x20] sm:$0xff]
  %v47 = vld [vmem:[%s2 + $0x28] sm:$0xff]
  %v48 = vld [vmem:[%s2 + $0x30] sm:$0xff]
  %v49 = vld [vmem:[%s2 + $0x38] sm:$0xff]
  %v50 = vld [vmem:[%s2 + $0x40] sm:$0xff]
  %v51 = vld [vmem:[%s2 + $0x48] sm:$0xff]
  %v52 = vld [vmem:[%s2 + $0x50] sm:$0xff]
  %v53 = vld [vmem:[%s2 + $0x58] sm:$0xff]
  %v54 = vld [vmem:[%s2 + $0x60] sm:$0xff]
  %v55 = vld [vmem:[%s2 + $0x68] sm:$0xff]
  %v56 = vld [vmem:[%s2 + $0x70] sm:$0xff]
  %v57 = vld [vmem:[%s2 + $0x78] sm:$0xff]
  %v58 = vld [vmem:[%s4] sm:$0x1]
  %v60 = vlaneseq
  %v61 = vshrl.u32 %v60, 7
  %v62 = vsub.s32 0, %v61
  %v63 = vrot.slane %v58, %v62
  %65 = vmatprep.subr.mxu0 0.0
  %66 = vmatpush1.msra.mxu0 %v57
  %67 = vmatprep.subr.mxu0 0.0
  %68 = vmatpush1.msra.mxu0 %v56
  %69 = vmatprep.subr.mxu0 0.0
  %70 = vmatpush1.msra.mxu0 %v55
  %71 = vmatprep.subr.mxu0 0.0
  %72 = vmatpush1.msra.mxu0 %v54
  %73 = vmatprep.subr.mxu0 0.0
  %74 = vmatpush1.msra.mxu0 %v53
  %75 = vmatprep.subr.mxu0 0.0
  %76 = vmatpush1.msra.mxu0 %v52
  %77 = vmatprep.subr.mxu0 0.0
  %78 = vmatpush1.msra.mxu0 %v51
  %79 = vmatprep.subr.mxu0 0.0
  %80 = vmatpush1.msra.mxu0 %v50
  %81 = vmatprep.subr.mxu0 0.0
  %82 = vmatpush1.msra.mxu0 %v49
  %83 = vmatprep.subr.mxu0 0.0
  %84 = vmatpush1.msra.mxu0 %v48
  %85 = vmatprep.subr.mxu0 0.0
  %86 = vmatpush1.msra.mxu0 %v47
  %87 = vmatprep.subr.mxu0 0.0
  %88 = vmatpush1.msra.mxu0 %v46
  %89 = vmatprep.subr.mxu0 0.0
  %90 = vmatpush1.msra.mxu0 %v45
  %91 = vmatprep.subr.mxu0 0.0
  %92 = vmatpush1.msra.mxu0 %v44
  %93 = vmatprep.subr.mxu0 0.0
  %94 = vmatpush1.msra.mxu0 %v43
  %95 = vmatprep.subr.mxu0 0.0
  %96 = vmatpush1.msra.mxu0 %v42
  %97 = vmatprep.subr.mxu0 0.0
  %98 = vmatpush2.msra.mxu0 0.0
  %99 = vmatprep.subr.mxu0 0.0
  %100 = vmatpush2.msra.mxu0 0.0
  %101 = vmatprep.subr.mxu0 0.0
  %102 = vmatpush2.msra.mxu0 0.0
  %103 = vmatprep.subr.mxu0 0.0
  %104 = vmatpush2.msra.mxu0 0.0
  %105 = vmatprep.subr.mxu0 0.0
  %106 = vmatpush2.msra.mxu0 0.0
  %107 = vmatprep.subr.mxu0 0.0
  %108 = vmatpush2.msra.mxu0 0.0
  %109 = vmatprep.subr.mxu0 0.0
  %110 = vmatpush2.msra.mxu0 0.0
  %111 = vmatprep.subr.mxu0 0.0
  %112 = vmatpush2.msra.mxu0 0.0
  %113 = vmatprep.subr.mxu0 0.0
  %114 = vmatpush2.msra.mxu0 0.0
  %115 = vmatprep.subr.mxu0 0.0
  %116 = vmatpush2.msra.mxu0 0.0
  %117 = vmatprep.subr.mxu0 0.0
  %118 = vmatpush2.msra.mxu0 0.0
  %119 = vmatprep.subr.mxu0 0.0
  %120 = vmatpush2.msra.mxu0 0.0
  %121 = vmatprep.subr.mxu0 0.0
  %122 = vmatpush2.msra.mxu0 0.0
  %123 = vmatprep.subr.mxu0 0.0
  %124 = vmatpush2.msra.mxu0 0.0
  %125 = vmatprep.subr.mxu0 0.0
  %126 = vmatpush2.msra.mxu0 0.0
  %127 = vmatprep.subr.mxu0 0.0
  %128 = vmatpush2.msra.mxu0 0.0
  %129 = vmatprep.mubr.f32.mxu0 0.0
  %130 = vmatmul.mubr.f32.gmra.mxu0 %v34
  %v131 = vpop.f32.mrf.mxu0
  %v132 = vadd.f32 %v63, %v131
  %v133 = vpop.f32.mrf.mxu0
  %134 = vmatprep.mubr.f32.mxu0 0.0
  %135 = vmatmul.mubr.f32.gmra.mxu0 %v35
  %v136 = vpop.f32.mrf.mxu0
  %v137 = vadd.f32 %v63, %v136
  %v138 = vpop.f32.mrf.mxu0
  %139 = vmatprep.mubr.f32.mxu0 0.0
  %140 = vmatmul.mubr.f32.gmra.mxu0 %v36
  %v141 = vpop.f32.mrf.mxu0
  %v142 = vadd.f32 %v63, %v141
  %v143 = vpop.f32.mrf.mxu0
  %144 = vmatprep.mubr.f32.mxu0 0.0
  %145 = vmatmul.mubr.f32.gmra.mxu0 %v37
  %v146 = vpop.f32.mrf.mxu0
  %v147 = vadd.f32 %v63, %v146
  %v148 = vpop.f32.mrf.mxu0
  %149 = vmatprep.mubr.f32.mxu0 0.0
  %150 = vmatmul.mubr.f32.gmra.mxu0 %v38
  %v151 = vpop.f32.mrf.mxu0
  %v152 = vadd.f32 %v63, %v151
  %v153 = vpop.f32.mrf.mxu0
  %154 = vmatprep.mubr.f32.mxu0 0.0
  %155 = vmatmul.mubr.f32.gmra.mxu0 %v39
  %v156 = vpop.f32.mrf.mxu0
  %v157 = vadd.f32 %v63, %v156
  %v158 = vpop.f32.mrf.mxu0
  %159 = vmatprep.mubr.f32.mxu0 0.0
  %160 = vmatmul.mubr.f32.gmra.mxu0 %v40
  %v161 = vpop.f32.mrf.mxu0
  %v162 = vadd.f32 %v63, %v161
  %v163 = vpop.f32.mrf.mxu0
  %164 = vmatprep.mubr.f32.mxu0 0.0
  %165 = vmatmul.mubr.f32.gmra.mxu0 %v41
  %v166 = vpop.f32.mrf.mxu0
  %v167 = vadd.f32 %v63, %v166
  %v168 = vpop.f32.mrf.mxu0
  %169 = vdwg.mxu0
  %170 = vst [vmem:[#allocation3] sm:$0xff] %v132
  %171 = vst [vmem:[#allocation3 + $0x8] sm:$0xff] %v137
  %172 = vst [vmem:[#allocation3 + $0x10] sm:$0xff] %v142
  %173 = vst [vmem:[#allocation3 + $0x18] sm:$0xff] %v147
  %174 = vst [vmem:[#allocation3 + $0x20] sm:$0xff] %v152
  %175 = vst [vmem:[#allocation3 + $0x28] sm:$0xff] %v157
  %176 = vst [vmem:[#allocation3 + $0x30] sm:$0xff] %v162
  %177 = vst [vmem:[#allocation3 + $0x38] sm:$0xff] %v167
  %v178 = vld [vmem:[%s3] sm:$0xff]
  %v179 = vld [vmem:[%s3 + $0x8] sm:$0xff]
  %v180 = vld [vmem:[%s3 + $0x10] sm:$0xff]
  %v181 = vld [vmem:[%s3 + $0x18] sm:$0xff]
  %v182 = vld [vmem:[%s3 + $0x20] sm:$0xff]
  %v183 = vld [vmem:[%s3 + $0x28] sm:$0xff]
  %v184 = vld [vmem:[%s3 + $0x30] sm:$0xff]
  %v185 = vld [vmem:[%s3 + $0x38] sm:$0xff]
  %v186 = vld [vmem:[%s3 + $0x40] sm:$0xff]
  %v187 = vld [vmem:[%s3 + $0x48] sm:$0xff]
  %v188 = vld [vmem:[%s3 + $0x50] sm:$0xff]
  %v189 = vld [vmem:[%s3 + $0x58] sm:$0xff]
  %v190 = vld [vmem:[%s3 + $0x60] sm:$0xff]
  %v191 = vld [vmem:[%s3 + $0x68] sm:$0xff]
  %v192 = vld [vmem:[%s3 + $0x70] sm:$0xff]
  %v193 = vld [vmem:[%s3 + $0x78] sm:$0xff]
  %v194 = vld [vmem:[#allocation2] sm:$0xff]
  %v195 = vld [vmem:[#allocation3] sm:$0xff]
  %196 = vmatprep.subr.mxu0 0.0
  %197 = vmatpush1.msra.mxu0 %v193
  %198 = vmatprep.subr.mxu0 0.0
  %199 = vmatpush1.msra.mxu0 %v192
  %200 = vmatprep.subr.mxu0 0.0
  %201 = vmatpush1.msra.mxu0 %v191
  %202 = vmatprep.subr.mxu0 0.0
  %203 = vmatpush1.msra.mxu0 %v190
  %204 = vmatprep.subr.mxu0 0.0
  %205 = vmatpush1.msra.mxu0 %v189
  %206 = vmatprep.subr.mxu0 0.0
  %207 = vmatpush1.msra.mxu0 %v188
  %208 = vmatprep.subr.mxu0 0.0
  %209 = vmatpush1.msra.mxu0 %v187
  %210 = vmatprep.subr.mxu0 0.0
  %211 = vmatpush1.msra.mxu0 %v186
  %212 = vmatprep.subr.mxu0 0.0
  %213 = vmatpush1.msra.mxu0 %v185
  %214 = vmatprep.subr.mxu0 0.0
  %215 = vmatpush1.msra.mxu0 %v184
  %216 = vmatprep.subr.mxu0 0.0
  %217 = vmatpush1.msra.mxu0 %v183
  %218 = vmatprep.subr.mxu0 0.0
  %219 = vmatpush1.msra.mxu0 %v182
  %220 = vmatprep.subr.mxu0 0.0
  %221 = vmatpush1.msra.mxu0 %v181
  %222 = vmatprep.subr.mxu0 0.0
  %223 = vmatpush1.msra.mxu0 %v180
  %224 = vmatprep.subr.mxu0 0.0
  %225 = vmatpush1.msra.mxu0 %v179
  %226 = vmatprep.subr.mxu0 0.0
  %227 = vmatpush1.msra.mxu0 %v178
  %228 = vmatprep.subr.mxu0 0.0
  %229 = vmatpush2.msra.mxu0 0.0
  %230 = vmatprep.subr.mxu0 0.0
  %231 = vmatpush2.msra.mxu0 0.0
  %232 = vmatprep.subr.mxu0 0.0
  %233 = vmatpush2.msra.mxu0 0.0
  %234 = vmatprep.subr.mxu0 0.0
  %235 = vmatpush2.msra.mxu0 0.0
  %236 = vmatprep.subr.mxu0 0.0
  %237 = vmatpush2.msra.mxu0 0.0
  %238 = vmatprep.subr.mxu0 0.0
  %239 = vmatpush2.msra.mxu0 0.0
  %240 = vmatprep.subr.mxu0 0.0
  %241 = vmatpush2.msra.mxu0 0.0
  %242 = vmatprep.subr.mxu0 0.0
  %243 = vmatpush2.msra.mxu0 0.0
  %244 = vmatprep.subr.mxu0 0.0
  %245 = vmatpush2.msra.mxu0 0.0
  %246 = vmatprep.subr.mxu0 0.0
  %247 = vmatpush2.msra.mxu0 0.0
  %248 = vmatprep.subr.mxu0 0.0
  %249 = vmatpush2.msra.mxu0 0.0
  %250 = vmatprep.subr.mxu0 0.0
  %251 = vmatpush2.msra.mxu0 0.0
  %252 = vmatprep.subr.mxu0 0.0
  %253 = vmatpush2.msra.mxu0 0.0
  %254 = vmatprep.subr.mxu0 0.0
  %255 = vmatpush2.msra.mxu0 0.0
  %256 = vmatprep.subr.mxu0 0.0
  %257 = vmatpush2.msra.mxu0 0.0
  %258 = vmatprep.subr.mxu0 0.0
  %259 = vmatpush2.msra.mxu0 0.0
  %260 = vmatprep.mubr.f32.mxu0 0.0
  %261 = vmatmul.mubr.f32.gmra.mxu0 %v194
  %v262 = vpop.f32.mrf.mxu0
  %v263 = vadd.f32 0.0, %v262
  %v264 = vpop.f32.mrf.mxu0
  %265 = vdwg.mxu0
  %v266 = vadd.f32 %v195, %v263
  %v267 = vtanh.pop %v266
  %268 = vst [vmem:[#allocation4] sm:$0xff] %v267
  %s269 = scalar_lea.vmem [#allocation3], 8
  %v270 = vld [vmem:[%s269] sm:$0xff]
  %271 = vmatprep.subr.mxu0 0.0
  %272 = vmatpush1.msra.mxu0 %v193
  %273 = vmatprep.subr.mxu0 0.0
  %274 = vmatpush1.msra.mxu0 %v192
  %275 = vmatprep.subr.mxu0 0.0
  %276 = vmatpush1.msra.mxu0 %v191
  %277 = vmatprep.subr.mxu0 0.0
  %278 = vmatpush1.msra.mxu0 %v190
  %279 = vmatprep.subr.mxu0 0.0
  %280 = vmatpush1.msra.mxu0 %v189
  %281 = vmatprep.subr.mxu0 0.0
  %282 = vmatpush1.msra.mxu0 %v188
  %283 = vmatprep.subr.mxu0 0.0
  %284 = vmatpush1.msra.mxu0 %v187
  %285 = vmatprep.subr.mxu0 0.0
  %286 = vmatpush1.msra.mxu0 %v186
  %287 = vmatprep.subr.mxu0 0.0
  %288 = vmatpush1.msra.mxu0 %v185
  %289 = vmatprep.subr.mxu0 0.0
  %290 = vmatpush1.msra.mxu0 %v184
  %291 = vmatprep.subr.mxu0 0.0
  %292 = vmatpush1.msra.mxu0 %v183
  %293 = vmatprep.subr.mxu0 0.0
  %294 = vmatpush1.msra.mxu0 %v182
  %295 = vmatprep.subr.mxu0 0.0
  %296 = vmatpush1.msra.mxu0 %v181
  %297 = vmatprep.subr.mxu0 0.0
  %298 = vmatpush1.msra.mxu0 %v180
  %299 = vmatprep.subr.mxu0 0.0
  %300 = vmatpush1.msra.mxu0 %v179
  %301 = vmatprep.subr.mxu0 0.0
  %302 = vmatpush1.msra.mxu0 %v178
  %303 = vmatprep.subr.mxu0 0.0
  %304 = vmatpush2.msra.mxu0 0.0
  %305 = vmatprep.subr.mxu0 0.0
  %306 = vmatpush2.msra.mxu0 0.0
  %307 = vmatprep.subr.mxu0 0.0
  %308 = vmatpush2.msra.mxu0 0.0
  %309 = vmatprep.subr.mxu0 0.0
  %310 = vmatpush2.msra.mxu0 0.0
  %311 = vmatprep.subr.mxu0 0.0
  %312 = vmatpush2.msra.mxu0 0.0
  %313 = vmatprep.subr.mxu0 0.0
  %314 = vmatpush2.msra.mxu0 0.0
  %315 = vmatprep.subr.mxu0 0.0
  %316 = vmatpush2.msra.mxu0 0.0
  %317 = vmatprep.subr.mxu0 0.0
  %318 = vmatpush2.msra.mxu0 0.0
  %319 = vmatprep.subr.mxu0 0.0
  %320 = vmatpush2.msra.mxu0 0.0
  %321 = vmatprep.subr.mxu0 0.0
  %322 = vmatpush2.msra.mxu0 0.0
  %323 = vmatprep.subr.mxu0 0.0
  %324 = vmatpush2.msra.mxu0 0.0
  %325 = vmatprep.subr.mxu0 0.0
  %326 = vmatpush2.msra.mxu0 0.0
  %327 = vmatprep.subr.mxu0 0.0
  %328 = vmatpush2.msra.mxu0 0.0
  %329 = vmatprep.subr.mxu0 0.0
  %330 = vmatpush2.msra.mxu0 0.0
  %331 = vmatprep.subr.mxu0 0.0
  %332 = vmatpush2.msra.mxu0 0.0
  %333 = vmatprep.subr.mxu0 0.0
  %334 = vmatpush2.msra.mxu0 0.0
  %335 = vmatprep.mubr.f32.mxu0 0.0
  %336 = vmatmul.mubr.f32.gmra.mxu0 %v267
  %v337 = vpop.f32.mrf.mxu0
  %v338 = vadd.f32 0.0, %v337
  %v339 = vpop.f32.mrf.mxu0
  %340 = vdwg.mxu0
  %v341 = vadd.f32 %v270, %v338
  %v342 = vtanh.pop %v341
  %s343 = scalar_lea.vmem [#allocation4], 8
  %344 = vst [vmem:[%s343] sm:$0xff] %v342
  %s345 = scalar_lea.vmem [#allocation3], 16
  %v346 = vld [vmem:[%s345] sm:$0xff]
  %347 = vmatprep.subr.mxu0 0.0
  %348 = vmatpush1.msra.mxu0 %v193
  %349 = vmatprep.subr.mxu0 0.0
  %350 = vmatpush1.msra.mxu0 %v192
  %351 = vmatprep.subr.mxu0 0.0
  %352 = vmatpush1.msra.mxu0 %v191
  %353 = vmatprep.subr.mxu0 0.0
  %354 = vmatpush1.msra.mxu0 %v190
  %355 = vmatprep.subr.mxu0 0.0
  %356 = vmatpush1.msra.mxu0 %v189
  %357 = vmatprep.subr.mxu0 0.0
  %358 = vmatpush1.msra.mxu0 %v188
  %359 = vmatprep.subr.mxu0 0.0
  %360 = vmatpush1.msra.mxu0 %v187
  %361 = vmatprep.subr.mxu0 0.0
  %362 = vmatpush1.msra.mxu0 %v186
  %363 = vmatprep.subr.mxu0 0.0
  %364 = vmatpush1.msra.mxu0 %v185
  %365 = vmatprep.subr.mxu0 0.0
  %366 = vmatpush1.msra.mxu0 %v184
  %367 = vmatprep.subr.mxu0 0.0
  %368 = vmatpush1.msra.mxu0 %v183
  %369 = vmatprep.subr.mxu0 0.0
  %370 = vmatpush1.msra.mxu0 %v182
  %371 = vmatprep.subr.mxu0 0.0
  %372 = vmatpush1.msra.mxu0 %v181
  %373 = vmatprep.subr.mxu0 0.0
  %374 = vmatpush1.msra.mxu0 %v180
  %375 = vmatprep.subr.mxu0 0.0
  %376 = vmatpush1.msra.mxu0 %v179
  %377 = vmatprep.subr.mxu0 0.0
  %378 = vmatpush1.msra.mxu0 %v178
  %379 = vmatprep.subr.mxu0 0.0
  %380 = vmatpush2.msra.mxu0 0.0
  %381 = vmatprep.subr.mxu0 0.0
  %382 = vmatpush2.msra.mxu0 0.0
  %383 = vmatprep.subr.mxu0 0.0
  %384 = vmatpush2.msra.mxu0 0.0
  %385 = vmatprep.subr.mxu0 0.0
  %386 = vmatpush2.msra.mxu0 0.0
  %387 = vmatprep.subr.mxu0 0.0
  %388 = vmatpush2.msra.mxu0 0.0
  %389 = vmatprep.subr.mxu0 0.0
  %390 = vmatpush2.msra.mxu0 0.0
  %391 = vmatprep.subr.mxu0 0.0
  %392 = vmatpush2.msra.mxu0 0.0
  %393 = vmatprep.subr.mxu0 0.0
  %394 = vmatpush2.msra.mxu0 0.0
  %395 = vmatprep.subr.mxu0 0.0
  %396 = vmatpush2.msra.mxu0 0.0
  %397 = vmatprep.subr.mxu0 0.0
  %398 = vmatpush2.msra.mxu0 0.0
  %399 = vmatprep.subr.mxu0 0.0
  %400 = vmatpush2.msra.mxu0 0.0
  %401 = vmatprep.subr.mxu0 0.0
  %402 = vmatpush2.msra.mxu0 0.0
  %403 = vmatprep.subr.mxu0 0.0
  %404 = vmatpush2.msra.mxu0 0.0
  %405 = vmatprep.subr.mxu0 0.0
  %406 = vmatpush2.msra.mxu0 0.0
  %407 = vmatprep.subr.mxu0 0.0
  %408 = vmatpush2.msra.mxu0 0.0
  %409 = vmatprep.subr.mxu0 0.0
  %410 = vmatpush2.msra.mxu0 0.0
  %411 = vmatprep.mubr.f32.mxu0 0.0
  %412 = vmatmul.mubr.f32.gmra.mxu0 %v342
  %v413 = vpop.f32.mrf.mxu0
  %v414 = vadd.f32 0.0, %v413
  %v415 = vpop.f32.mrf.mxu0
  %416 = vdwg.mxu0
  %v417 = vadd.f32 %v346, %v414
  %v418 = vtanh.pop %v417
  %s419 = scalar_lea.vmem [#allocation4], 16
  %420 = vst [vmem:[%s419] sm:$0xff] %v418
  %s421 = scalar_lea.vmem [#allocation3], 24
  %v422 = vld [vmem:[%s421] sm:$0xff]
  %423 = vmatprep.subr.mxu0 0.0
  %424 = vmatpush1.msra.mxu0 %v193
  %425 = vmatprep.subr.mxu0 0.0
  %426 = vmatpush1.msra.mxu0 %v192
  %427 = vmatprep.subr.mxu0 0.0
  %428 = vmatpush1.msra.mxu0 %v191
  %429 = vmatprep.subr.mxu0 0.0
  %430 = vmatpush1.msra.mxu0 %v190
  %431 = vmatprep.subr.mxu0 0.0
  %432 = vmatpush1.msra.mxu0 %v189
  %433 = vmatprep.subr.mxu0 0.0
  %434 = vmatpush1.msra.mxu0 %v188
  %435 = vmatprep.subr.mxu0 0.0
  %436 = vmatpush1.msra.mxu0 %v187
  %437 = vmatprep.subr.mxu0 0.0
  %438 = vmatpush1.msra.mxu0 %v186
  %439 = vmatprep.subr.mxu0 0.0
  %440 = vmatpush1.msra.mxu0 %v185
  %441 = vmatprep.subr.mxu0 0.0
  %442 = vmatpush1.msra.mxu0 %v184
  %443 = vmatprep.subr.mxu0 0.0
  %444 = vmatpush1.msra.mxu0 %v183
  %445 = vmatprep.subr.mxu0 0.0
  %446 = vmatpush1.msra.mxu0 %v182
  %447 = vmatprep.subr.mxu0 0.0
  %448 = vmatpush1.msra.mxu0 %v181
  %449 = vmatprep.subr.mxu0 0.0
  %450 = vmatpush1.msra.mxu0 %v180
  %451 = vmatprep.subr.mxu0 0.0
  %452 = vmatpush1.msra.mxu0 %v179
  %453 = vmatprep.subr.mxu0 0.0
  %454 = vmatpush1.msra.mxu0 %v178
  %455 = vmatprep.subr.mxu0 0.0
  %456 = vmatpush2.msra.mxu0 0.0
  %457 = vmatprep.subr.mxu0 0.0
  %458 = vmatpush2.msra.mxu0 0.0
  %459 = vmatprep.subr.mxu0 0.0
  %460 = vmatpush2.msra.mxu0 0.0
  %461 = vmatprep.subr.mxu0 0.0
  %462 = vmatpush2.msra.mxu0 0.0
  %463 = vmatprep.subr.mxu0 0.0
  %464 = vmatpush2.msra.mxu0 0.0
  %465 = vmatprep.subr.mxu0 0.0
  %466 = vmatpush2.msra.mxu0 0.0
  %467 = vmatprep.subr.mxu0 0.0
  %468 = vmatpush2.msra.mxu0 0.0
  %469 = vmatprep.subr.mxu0 0.0
  %470 = vmatpush2.msra.mxu0 0.0
  %471 = vmatprep.subr.mxu0 0.0
  %472 = vmatpush2.msra.mxu0 0.0
  %473 = vmatprep.subr.mxu0 0.0
  %474 = vmatpush2.msra.mxu0 0.0
  %475 = vmatprep.subr.mxu0 0.0
  %476 = vmatpush2.msra.mxu0 0.0
  %477 = vmatprep.subr.mxu0 0.0
  %478 = vmatpush2.msra.mxu0 0.0
  %479 = vmatprep.subr.mxu0 0.0
  %480 = vmatpush2.msra.mxu0 0.0
  %481 = vmatprep.subr.mxu0 0.0
  %482 = vmatpush2.msra.mxu0 0.0
  %483 = vmatprep.subr.mxu0 0.0
  %484 = vmatpush2.msra.mxu0 0.0
  %485 = vmatprep.subr.mxu0 0.0
  %486 = vmatpush2.msra.mxu0 0.0
  %487 = vmatprep.mubr.f32.mxu0 0.0
  %488 = vmatmul.mubr.f32.gmra.mxu0 %v418
  %v489 = vpop.f32.mrf.mxu0
  %v490 = vadd.f32 0.0, %v489
  %v491 = vpop.f32.mrf.mxu0
  %492 = vdwg.mxu0
  %v493 = vadd.f32 %v422, %v490
  %v494 = vtanh.pop %v493
  %s495 = scalar_lea.vmem [#allocation4], 24
  %496 = vst [vmem:[%s495] sm:$0xff] %v494
  %s497 = scalar_lea.vmem [#allocation3], 32
  %v498 = vld [vmem:[%s497] sm:$0xff]
  %499 = vmatprep.subr.mxu0 0.0
  %500 = vmatpush1.msra.mxu0 %v193
  %501 = vmatprep.subr.mxu0 0.0
  %502 = vmatpush1.msra.mxu0 %v192
  %503 = vmatprep.subr.mxu0 0.0
  %504 = vmatpush1.msra.mxu0 %v191
  %505 = vmatprep.subr.mxu0 0.0
  %506 = vmatpush1.msra.mxu0 %v190
  %507 = vmatprep.subr.mxu0 0.0
  %508 = vmatpush1.msra.mxu0 %v189
  %509 = vmatprep.subr.mxu0 0.0
  %510 = vmatpush1.msra.mxu0 %v188
  %511 = vmatprep.subr.mxu0 0.0
  %512 = vmatpush1.msra.mxu0 %v187
  %513 = vmatprep.subr.mxu0 0.0
  %514 = vmatpush1.msra.mxu0 %v186
  %515 = vmatprep.subr.mxu0 0.0
  %516 = vmatpush1.msra.mxu0 %v185
  %517 = vmatprep.subr.mxu0 0.0
  %518 = vmatpush1.msra.mxu0 %v184
  %519 = vmatprep.subr.mxu0 0.0
  %520 = vmatpush1.msra.mxu0 %v183
  %521 = vmatprep.subr.mxu0 0.0
  %522 = vmatpush1.msra.mxu0 %v182
  %523 = vmatprep.subr.mxu0 0.0
  %524 = vmatpush1.msra.mxu0 %v181
  %525 = vmatprep.subr.mxu0 0.0
  %526 = vmatpush1.msra.mxu0 %v180
  %527 = vmatprep.subr.mxu0 0.0
  %528 = vmatpush1.msra.mxu0 %v179
  %529 = vmatprep.subr.mxu0 0.0
  %530 = vmatpush1.msra.mxu0 %v178
  %531 = vmatprep.subr.mxu0 0.0
  %532 = vmatpush2.msra.mxu0 0.0
  %533 = vmatprep.subr.mxu0 0.0
  %534 = vmatpush2.msra.mxu0 0.0
  %535 = vmatprep.subr.mxu0 0.0
  %536 = vmatpush2.msra.mxu0 0.0
  %537 = vmatprep.subr.mxu0 0.0
  %538 = vmatpush2.msra.mxu0 0.0
  %539 = vmatprep.subr.mxu0 0.0
  %540 = vmatpush2.msra.mxu0 0.0
  %541 = vmatprep.subr.mxu0 0.0
  %542 = vmatpush2.msra.mxu0 0.0
  %543 = vmatprep.subr.mxu0 0.0
  %544 = vmatpush2.msra.mxu0 0.0
  %545 = vmatprep.subr.mxu0 0.0
  %546 = vmatpush2.msra.mxu0 0.0
  %547 = vmatprep.subr.mxu0 0.0
  %548 = vmatpush2.msra.mxu0 0.0
  %549 = vmatprep.subr.mxu0 0.0
  %550 = vmatpush2.msra.mxu0 0.0
  %551 = vmatprep.subr.mxu0 0.0
  %552 = vmatpush2.msra.mxu0 0.0
  %553 = vmatprep.subr.mxu0 0.0
  %554 = vmatpush2.msra.mxu0 0.0
  %555 = vmatprep.subr.mxu0 0.0
  %556 = vmatpush2.msra.mxu0 0.0
  %557 = vmatprep.subr.mxu0 0.0
  %558 = vmatpush2.msra.mxu0 0.0
  %559 = vmatprep.subr.mxu0 0.0
  %560 = vmatpush2.msra.mxu0 0.0
  %561 = vmatprep.subr.mxu0 0.0
  %562 = vmatpush2.msra.mxu0 0.0
  %563 = vmatprep.mubr.f32.mxu0 0.0
  %564 = vmatmul.mubr.f32.gmra.mxu0 %v494
  %v565 = vpop.f32.mrf.mxu0
  %v566 = vadd.f32 0.0, %v565
  %v567 = vpop.f32.mrf.mxu0
  %568 = vdwg.mxu0
  %v569 = vadd.f32 %v498, %v566
  %v570 = vtanh.pop %v569
  %s571 = scalar_lea.vmem [#allocation4], 32
  %572 = vst [vmem:[%s571] sm:$0xff] %v570
  %s573 = scalar_lea.vmem [#allocation3], 40
  %v574 = vld [vmem:[%s573] sm:$0xff]
  %575 = vmatprep.subr.mxu0 0.0
  %576 = vmatpush1.msra.mxu0 %v193
  %577 = vmatprep.subr.mxu0 0.0
  %578 = vmatpush1.msra.mxu0 %v192
  %579 = vmatprep.subr.mxu0 0.0
  %580 = vmatpush1.msra.mxu0 %v191
  %581 = vmatprep.subr.mxu0 0.0
  %582 = vmatpush1.msra.mxu0 %v190
  %583 = vmatprep.subr.mxu0 0.0
  %584 = vmatpush1.msra.mxu0 %v189
  %585 = vmatprep.subr.mxu0 0.0
  %586 = vmatpush1.msra.mxu0 %v188
  %587 = vmatprep.subr.mxu0 0.0
  %588 = vmatpush1.msra.mxu0 %v187
  %589 = vmatprep.subr.mxu0 0.0
  %590 = vmatpush1.msra.mxu0 %v186
  %591 = vmatprep.subr.mxu0 0.0
  %592 = vmatpush1.msra.mxu0 %v185
  %593 = vmatprep.subr.mxu0 0.0
  %594 = vmatpush1.msra.mxu0 %v184
  %595 = vmatprep.subr.mxu0 0.0
  %596 = vmatpush1.msra.mxu0 %v183
  %597 = vmatprep.subr.mxu0 0.0
  %598 = vmatpush1.msra.mxu0 %v182
  %599 = vmatprep.subr.mxu0 0.0
  %600 = vmatpush1.msra.mxu0 %v181
  %601 = vmatprep.subr.mxu0 0.0
  %602 = vmatpush1.msra.mxu0 %v180
  %603 = vmatprep.subr.mxu0 0.0
  %604 = vmatpush1.msra.mxu0 %v179
  %605 = vmatprep.subr.mxu0 0.0
  %606 = vmatpush1.msra.mxu0 %v178
  %607 = vmatprep.subr.mxu0 0.0
  %608 = vmatpush2.msra.mxu0 0.0
  %609 = vmatprep.subr.mxu0 0.0
  %610 = vmatpush2.msra.mxu0 0.0
  %611 = vmatprep.subr.mxu0 0.0
  %612 = vmatpush2.msra.mxu0 0.0
  %613 = vmatprep.subr.mxu0 0.0
  %614 = vmatpush2.msra.mxu0 0.0
  %615 = vmatprep.subr.mxu0 0.0
  %616 = vmatpush2.msra.mxu0 0.0
  %617 = vmatprep.subr.mxu0 0.0
  %618 = vmatpush2.msra.mxu0 0.0
  %619 = vmatprep.subr.mxu0 0.0
  %620 = vmatpush2.msra.mxu0 0.0
  %621 = vmatprep.subr.mxu0 0.0
  %622 = vmatpush2.msra.mxu0 0.0
  %623 = vmatprep.subr.mxu0 0.0
  %624 = vmatpush2.msra.mxu0 0.0
  %625 = vmatprep.subr.mxu0 0.0
  %626 = vmatpush2.msra.mxu0 0.0
  %627 = vmatprep.subr.mxu0 0.0
  %628 = vmatpush2.msra.mxu0 0.0
  %629 = vmatprep.subr.mxu0 0.0
  %630 = vmatpush2.msra.mxu0 0.0
  %631 = vmatprep.subr.mxu0 0.0
  %632 = vmatpush2.msra.mxu0 0.0
  %633 = vmatprep.subr.mxu0 0.0
  %634 = vmatpush2.msra.mxu0 0.0
  %635 = vmatprep.subr.mxu0 0.0
  %636 = vmatpush2.msra.mxu0 0.0
  %637 = vmatprep.subr.mxu0 0.0
  %638 = vmatpush2.msra.mxu0 0.0
  %639 = vmatprep.mubr.f32.mxu0 0.0
  %640 = vmatmul.mubr.f32.gmra.mxu0 %v570
  %v641 = vpop.f32.mrf.mxu0
  %v642 = vadd.f32 0.0, %v641
  %v643 = vpop.f32.mrf.mxu0
  %644 = vdwg.mxu0
  %v645 = vadd.f32 %v574, %v642
  %v646 = vtanh.pop %v645
  %s647 = scalar_lea.vmem [#allocation4], 40
  %648 = vst [vmem:[%s647] sm:$0xff] %v646
  %s649 = scalar_lea.vmem [#allocation3], 48
  %v650 = vld [vmem:[%s649] sm:$0xff]
  %651 = vmatprep.subr.mxu0 0.0
  %652 = vmatpush1.msra.mxu0 %v193
  %653 = vmatprep.subr.mxu0 0.0
  %654 = vmatpush1.msra.mxu0 %v192
  %655 = vmatprep.subr.mxu0 0.0
  %656 = vmatpush1.msra.mxu0 %v191
  %657 = vmatprep.subr.mxu0 0.0
  %658 = vmatpush1.msra.mxu0 %v190
  %659 = vmatprep.subr.mxu0 0.0
  %660 = vmatpush1.msra.mxu0 %v189
  %661 = vmatprep.subr.mxu0 0.0
  %662 = vmatpush1.msra.mxu0 %v188
  %663 = vmatprep.subr.mxu0 0.0
  %664 = vmatpush1.msra.mxu0 %v187
  %665 = vmatprep.subr.mxu0 0.0
  %666 = vmatpush1.msra.mxu0 %v186
  %667 = vmatprep.subr.mxu0 0.0
  %668 = vmatpush1.msra.mxu0 %v185
  %669 = vmatprep.subr.mxu0 0.0
  %670 = vmatpush1.msra.mxu0 %v184
  %671 = vmatprep.subr.mxu0 0.0
  %672 = vmatpush1.msra.mxu0 %v183
  %673 = vmatprep.subr.mxu0 0.0
  %674 = vmatpush1.msra.mxu0 %v182
  %675 = vmatprep.subr.mxu0 0.0
  %676 = vmatpush1.msra.mxu0 %v181
  %677 = vmatprep.subr.mxu0 0.0
  %678 = vmatpush1.msra.mxu0 %v180
  %679 = vmatprep.subr.mxu0 0.0
  %680 = vmatpush1.msra.mxu0 %v179
  %681 = vmatprep.subr.mxu0 0.0
  %682 = vmatpush1.msra.mxu0 %v178
  %683 = vmatprep.subr.mxu0 0.0
  %684 = vmatpush2.msra.mxu0 0.0
  %685 = vmatprep.subr.mxu0 0.0
  %686 = vmatpush2.msra.mxu0 0.0
  %687 = vmatprep.subr.mxu0 0.0
  %688 = vmatpush2.msra.mxu0 0.0
  %689 = vmatprep.subr.mxu0 0.0
  %690 = vmatpush2.msra.mxu0 0.0
  %691 = vmatprep.subr.mxu0 0.0
  %692 = vmatpush2.msra.mxu0 0.0
  %693 = vmatprep.subr.mxu0 0.0
  %694 = vmatpush2.msra.mxu0 0.0
  %695 = vmatprep.subr.mxu0 0.0
  %696 = vmatpush2.msra.mxu0 0.0
  %697 = vmatprep.subr.mxu0 0.0
  %698 = vmatpush2.msra.mxu0 0.0
  %699 = vmatprep.subr.mxu0 0.0
  %700 = vmatpush2.msra.mxu0 0.0
  %701 = vmatprep.subr.mxu0 0.0
  %702 = vmatpush2.msra.mxu0 0.0
  %703 = vmatprep.subr.mxu0 0.0
  %704 = vmatpush2.msra.mxu0 0.0
  %705 = vmatprep.subr.mxu0 0.0
  %706 = vmatpush2.msra.mxu0 0.0
  %707 = vmatprep.subr.mxu0 0.0
  %708 = vmatpush2.msra.mxu0 0.0
  %709 = vmatprep.subr.mxu0 0.0
  %710 = vmatpush2.msra.mxu0 0.0
  %711 = vmatprep.subr.mxu0 0.0
  %712 = vmatpush2.msra.mxu0 0.0
  %713 = vmatprep.subr.mxu0 0.0
  %714 = vmatpush2.msra.mxu0 0.0
  %715 = vmatprep.mubr.f32.mxu0 0.0
  %716 = vmatmul.mubr.f32.gmra.mxu0 %v646
  %v717 = vpop.f32.mrf.mxu0
  %v718 = vadd.f32 0.0, %v717
  %v719 = vpop.f32.mrf.mxu0
  %720 = vdwg.mxu0
  %v721 = vadd.f32 %v650, %v718
  %v722 = vtanh.pop %v721
  %s723 = scalar_lea.vmem [#allocation4], 48
  %724 = vst [vmem:[%s723] sm:$0xff] %v722
  %s725 = scalar_lea.vmem [#allocation3], 56
  %v726 = vld [vmem:[%s725] sm:$0xff]
  %727 = vmatprep.subr.mxu0 0.0
  %728 = vmatpush1.msra.mxu0 %v193
  %729 = vmatprep.subr.mxu0 0.0
  %730 = vmatpush1.msra.mxu0 %v192
  %731 = vmatprep.subr.mxu0 0.0
  %732 = vmatpush1.msra.mxu0 %v191
  %733 = vmatprep.subr.mxu0 0.0
  %734 = vmatpush1.msra.mxu0 %v190
  %735 = vmatprep.subr.mxu0 0.0
  %736 = vmatpush1.msra.mxu0 %v189
  %737 = vmatprep.subr.mxu0 0.0
  %738 = vmatpush1.msra.mxu0 %v188
  %739 = vmatprep.subr.mxu0 0.0
  %740 = vmatpush1.msra.mxu0 %v187
  %741 = vmatprep.subr.mxu0 0.0
  %742 = vmatpush1.msra.mxu0 %v186
  %743 = vmatprep.subr.mxu0 0.0
  %744 = vmatpush1.msra.mxu0 %v185
  %745 = vmatprep.subr.mxu0 0.0
  %746 = vmatpush1.msra.mxu0 %v184
  %747 = vmatprep.subr.mxu0 0.0
  %748 = vmatpush1.msra.mxu0 %v183
  %749 = vmatprep.subr.mxu0 0.0
  %750 = vmatpush1.msra.mxu0 %v182
  %751 = vmatprep.subr.mxu0 0.0
  %752 = vmatpush1.msra.mxu0 %v181
  %753 = vmatprep.subr.mxu0 0.0
  %754 = vmatpush1.msra.mxu0 %v180
  %755 = vmatprep.subr.mxu0 0.0
  %756 = vmatpush1.msra.mxu0 %v179
  %757 = vmatprep.subr.mxu0 0.0
  %758 = vmatpush1.msra.mxu0 %v178
  %759 = vmatprep.subr.mxu0 0.0
  %760 = vmatpush2.msra.mxu0 0.0
  %761 = vmatprep.subr.mxu0 0.0
  %762 = vmatpush2.msra.mxu0 0.0
  %763 = vmatprep.subr.mxu0 0.0
  %764 = vmatpush2.msra.mxu0 0.0
  %765 = vmatprep.subr.mxu0 0.0
  %766 = vmatpush2.msra.mxu0 0.0
  %767 = vmatprep.subr.mxu0 0.0
  %768 = vmatpush2.msra.mxu0 0.0
  %769 = vmatprep.subr.mxu0 0.0
  %770 = vmatpush2.msra.mxu0 0.0
  %771 = vmatprep.subr.mxu0 0.0
  %772 = vmatpush2.msra.mxu0 0.0
  %773 = vmatprep.subr.mxu0 0.0
  %774 = vmatpush2.msra.mxu0 0.0
  %775 = vmatprep.subr.mxu0 0.0
  %776 = vmatpush2.msra.mxu0 0.0
  %777 = vmatprep.subr.mxu0 0.0
  %778 = vmatpush2.msra.mxu0 0.0
  %779 = vmatprep.subr.mxu0 0.0
  %780 = vmatpush2.msra.mxu0 0.0
  %781 = vmatprep.subr.mxu0 0.0
  %782 = vmatpush2.msra.mxu0 0.0
  %783 = vmatprep.subr.mxu0 0.0
  %784 = vmatpush2.msra.mxu0 0.0
  %785 = vmatprep.subr.mxu0 0.0
  %786 = vmatpush2.msra.mxu0 0.0
  %787 = vmatprep.subr.mxu0 0.0
  %788 = vmatpush2.msra.mxu0 0.0
  %789 = vmatprep.subr.mxu0 0.0
  %790 = vmatpush2.msra.mxu0 0.0
  %791 = vmatprep.mubr.f32.mxu0 0.0
  %792 = vmatmul.mubr.f32.gmra.mxu0 %v722
  %v793 = vpop.f32.mrf.mxu0
  %v794 = vadd.f32 0.0, %v793
  %v795 = vpop.f32.mrf.mxu0
  %796 = vdwg.mxu0
  %v797 = vadd.f32 %v726, %v794
  %v798 = vtanh.pop %v797
  %s799 = scalar_lea.vmem [#allocation4], 56
  %800 = vst [vmem:[%s799] sm:$0xff] %v798
  %801 = vst [vmem:[#allocation2] sm:$0xff] %v798
  %v802 = vld [vmem:[#allocation4] sm:$0xff]
  %v803 = vld [vmem:[#allocation4 + $0x8] sm:$0xff]
  %v804 = vld [vmem:[#allocation4 + $0x10] sm:$0xff]
  %v805 = vld [vmem:[#allocation4 + $0x18] sm:$0xff]
  %v806 = vld [vmem:[#allocation4 + $0x20] sm:$0xff]
  %v807 = vld [vmem:[#allocation4 + $0x28] sm:$0xff]
  %v808 = vld [vmem:[#allocation4 + $0x30] sm:$0xff]
  %v809 = vld [vmem:[#allocation4 + $0x38] sm:$0xff]
  %v810 = vld [vmem:[%s5] sm:$0xff]
  %v811 = vld [vmem:[%s5 + $0x8] sm:$0xff]
  %v812 = vld [vmem:[%s5 + $0x10] sm:$0xff]
  %v813 = vld [vmem:[%s5 + $0x18] sm:$0xff]
  %v814 = vld [vmem:[%s5 + $0x20] sm:$0xff]
  %v815 = vld [vmem:[%s5 + $0x28] sm:$0xff]
  %v816 = vld [vmem:[%s5 + $0x30] sm:$0xff]
  %v817 = vld [vmem:[%s5 + $0x38] sm:$0xff]
  %v818 = vld [vmem:[%s5 + $0x40] sm:$0xff]
  %v819 = vld [vmem:[%s5 + $0x48] sm:$0xff]
  %v820 = vld [vmem:[%s5 + $0x50] sm:$0xff]
  %v821 = vld [vmem:[%s5 + $0x58] sm:$0xff]
  %v822 = vld [vmem:[%s5 + $0x60] sm:$0xff]
  %v823 = vld [vmem:[%s5 + $0x68] sm:$0xff]
  %v824 = vld [vmem:[%s5 + $0x70] sm:$0xff]
  %v825 = vld [vmem:[%s5 + $0x78] sm:$0xff]
  %v826 = vld [vmem:[%s6] sm:$0x1]
  %v828 = vlaneseq
  %v829 = vshrl.u32 %v828, 7
  %v830 = vsub.s32 0, %v829
  %v831 = vrot.slane %v826, %v830
  %833 = vmatprep.subr.mxu0 0.0
  %834 = vmatpush1.msra.mxu0 %v825
  %835 = vmatprep.subr.mxu0 0.0
  %836 = vmatpush1.msra.mxu0 %v824
  %837 = vmatprep.subr.mxu0 0.0
  %838 = vmatpush1.msra.mxu0 %v823
  %839 = vmatprep.subr.mxu0 0.0
  %840 = vmatpush1.msra.mxu0 %v822
  %841 = vmatprep.subr.mxu0 0.0
  %842 = vmatpush1.msra.mxu0 %v821
  %843 = vmatprep.subr.mxu0 0.0
  %844 = vmatpush1.msra.mxu0 %v820
  %845 = vmatprep.subr.mxu0 0.0
  %846 = vmatpush1.msra.mxu0 %v819
  %847 = vmatprep.subr.mxu0 0.0
  %848 = vmatpush1.msra.mxu0 %v818
  %849 = vmatprep.subr.mxu0 0.0
  %850 = vmatpush1.msra.mxu0 %v817
  %851 = vmatprep.subr.mxu0 0.0
  %852 = vmatpush1.msra.mxu0 %v816
  %853 = vmatprep.subr.mxu0 0.0
  %854 = vmatpush1.msra.mxu0 %v815
  %855 = vmatprep.subr.mxu0 0.0
  %856 = vmatpush1.msra.mxu0 %v814
  %857 = vmatprep.subr.mxu0 0.0
  %858 = vmatpush1.msra.mxu0 %v813
  %859 = vmatprep.subr.mxu0 0.0
  %860 = vmatpush1.msra.mxu0 %v812
  %861 = vmatprep.subr.mxu0 0.0
  %862 = vmatpush1.msra.mxu0 %v811
  %863 = vmatprep.subr.mxu0 0.0
  %864 = vmatpush1.msra.mxu0 %v810
  %865 = vmatprep.subr.mxu0 0.0
  %866 = vmatpush2.msra.mxu0 0.0
  %867 = vmatprep.subr.mxu0 0.0
  %868 = vmatpush2.msra.mxu0 0.0
  %869 = vmatprep.subr.mxu0 0.0
  %870 = vmatpush2.msra.mxu0 0.0
  %871 = vmatprep.subr.mxu0 0.0
  %872 = vmatpush2.msra.mxu0 0.0
  %873 = vmatprep.subr.mxu0 0.0
  %874 = vmatpush2.msra.mxu0 0.0
  %875 = vmatprep.subr.mxu0 0.0
  %876 = vmatpush2.msra.mxu0 0.0
  %877 = vmatprep.subr.mxu0 0.0
  %878 = vmatpush2.msra.mxu0 0.0
  %879 = vmatprep.subr.mxu0 0.0
  %880 = vmatpush2.msra.mxu0 0.0
  %881 = vmatprep.subr.mxu0 0.0
  %882 = vmatpush2.msra.mxu0 0.0
  %883 = vmatprep.subr.mxu0 0.0
  %884 = vmatpush2.msra.mxu0 0.0
  %885 = vmatprep.subr.mxu0 0.0
  %886 = vmatpush2.msra.mxu0 0.0
  %887 = vmatprep.subr.mxu0 0.0
  %888 = vmatpush2.msra.mxu0 0.0
  %889 = vmatprep.subr.mxu0 0.0
  %890 = vmatpush2.msra.mxu0 0.0
  %891 = vmatprep.subr.mxu0 0.0
  %892 = vmatpush2.msra.mxu0 0.0
  %893 = vmatprep.subr.mxu0 0.0
  %894 = vmatpush2.msra.mxu0 0.0
  %895 = vmatprep.subr.mxu0 0.0
  %896 = vmatpush2.msra.mxu0 0.0
  %897 = vmatprep.mubr.f32.mxu0 0.0
  %898 = vmatmul.mubr.f32.gmra.mxu0 %v802
  %v899 = vpop.f32.mrf.mxu0
  %v900 = vadd.f32 %v831, %v899
  %v901 = vpop.f32.mrf.mxu0
  %902 = vmatprep.mubr.f32.mxu0 0.0
  %903 = vmatmul.mubr.f32.gmra.mxu0 %v803
  %v904 = vpop.f32.mrf.mxu0
  %v905 = vadd.f32 %v831, %v904
  %v906 = vpop.f32.mrf.mxu0
  %907 = vmatprep.mubr.f32.mxu0 0.0
  %908 = vmatmul.mubr.f32.gmra.mxu0 %v804
  %v909 = vpop.f32.mrf.mxu0
  %v910 = vadd.f32 %v831, %v909
  %v911 = vpop.f32.mrf.mxu0
  %912 = vmatprep.mubr.f32.mxu0 0.0
  %913 = vmatmul.mubr.f32.gmra.mxu0 %v805
  %v914 = vpop.f32.mrf.mxu0
  %v915 = vadd.f32 %v831, %v914
  %v916 = vpop.f32.mrf.mxu0
  %917 = vmatprep.mubr.f32.mxu0 0.0
  %918 = vmatmul.mubr.f32.gmra.mxu0 %v806
  %v919 = vpop.f32.mrf.mxu0
  %v920 = vadd.f32 %v831, %v919
  %v921 = vpop.f32.mrf.mxu0
  %922 = vmatprep.mubr.f32.mxu0 0.0
  %923 = vmatmul.mubr.f32.gmra.mxu0 %v807
  %v924 = vpop.f32.mrf.mxu0
  %v925 = vadd.f32 %v831, %v924
  %v926 = vpop.f32.mrf.mxu0
  %927 = vmatprep.mubr.f32.mxu0 0.0
  %928 = vmatmul.mubr.f32.gmra.mxu0 %v808
  %v929 = vpop.f32.mrf.mxu0
  %v930 = vadd.f32 %v831, %v929
  %v931 = vpop.f32.mrf.mxu0
  %932 = vmatprep.mubr.f32.mxu0 0.0
  %933 = vmatmul.mubr.f32.gmra.mxu0 %v809
  %v934 = vpop.f32.mrf.mxu0
  %v935 = vadd.f32 %v831, %v934
  %v936 = vpop.f32.mrf.mxu0
  %937 = vdwg.mxu0
  %938 = vmax.xlane.f32.xlu0 %v900
  %v939 = vpop.xlane.xlu0 %938
  %940 = vmax.xlane.f32.xlu0 %v905
  %v941 = vpop.xlane.xlu0 %940
  %942 = vmax.xlane.f32.xlu0 %v910
  %v943 = vpop.xlane.xlu0 %942
  %944 = vmax.xlane.f32.xlu0 %v915
  %v945 = vpop.xlane.xlu0 %944
  %946 = vmax.xlane.f32.xlu0 %v920
  %v947 = vpop.xlane.xlu0 %946
  %948 = vmax.xlane.f32.xlu0 %v925
  %v949 = vpop.xlane.xlu0 %948
  %950 = vmax.xlane.f32.xlu0 %v930
  %v951 = vpop.xlane.xlu0 %950
  %952 = vmax.xlane.f32.xlu0 %v935
  %v953 = vpop.xlane.xlu0 %952
  %v954 = vsub.f32 %v900, %v939
  %v955 = vsub.f32 %v905, %v941
  %v956 = vsub.f32 %v910, %v943
  %v957 = vsub.f32 %v915, %v945
  %v958 = vsub.f32 %v920, %v947
  %v959 = vsub.f32 %v925, %v949
  %v960 = vsub.f32 %v930, %v951
  %v961 = vsub.f32 %v935, %v953
  %v962 = vmul.f32 %v954, 1.442695
  %v963 = vpow.pop %v962
  %v964 = vmul.f32 %v955, 1.442695
  %v965 = vpow.pop %v964
  %v966 = vmul.f32 %v956, 1.442695
  %v967 = vpow.pop %v966
  %v968 = vmul.f32 %v957, 1.442695
  %v969 = vpow.pop %v968
  %v970 = vmul.f32 %v958, 1.442695
  %v971 = vpow.pop %v970
  %v972 = vmul.f32 %v959, 1.442695
  %v973 = vpow.pop %v972
  %v974 = vmul.f32 %v960, 1.442695
  %v975 = vpow.pop %v974
  %v976 = vmul.f32 %v961, 1.442695
  %v977 = vpow.pop %v976
  %978 = vadd.xlane.f32.xlu0 %v963
  %v979 = vpop.xlane.xlu0 %978
  %980 = vadd.xlane.f32.xlu0 %v965
  %v981 = vpop.xlane.xlu0 %980
  %982 = vadd.xlane.f32.xlu0 %v967
  %v983 = vpop.xlane.xlu0 %982
  %984 = vadd.xlane.f32.xlu0 %v969
  %v985 = vpop.xlane.xlu0 %984
  %986 = vadd.xlane.f32.xlu0 %v971
  %v987 = vpop.xlane.xlu0 %986
  %988 = vadd.xlane.f32.xlu0 %v973
  %v989 = vpop.xlane.xlu0 %988
  %990 = vadd.xlane.f32.xlu0 %v975
  %v991 = vpop.xlane.xlu0 %990
  %992 = vadd.xlane.f32.xlu0 %v977
  %v993 = vpop.xlane.xlu0 %992
  %v994 = vrcp.pop %v979
  %v995 = vrcp.pop %v981
  %v996 = vrcp.pop %v983
  %v997 = vrcp.pop %v985
  %v998 = vrcp.pop %v987
  %v999 = vrcp.pop %v989
  %v1000 = vrcp.pop %v991
  %v1001 = vrcp.pop %v993
  %v1002 = vmul.f32 %v963, %v994
  %v1003 = vmul.f32 %v965, %v995
  %v1004 = vmul.f32 %v967, %v996
  %v1005 = vmul.f32 %v969, %v997
  %v1006 = vmul.f32 %v971, %v998
  %v1007 = vmul.f32 %v973, %v999
  %v1008 = vmul.f32 %v975, %v1000
  %v1009 = vmul.f32 %v977, %v1001
  %1010 = vst [vmem:[%s7] sm:$0xff] %v1002
  %1011 = vst [vmem:[%s7 + $0x8] sm:$0xff] %v1003
  %1012 = vst [vmem:[%s7 + $0x10] sm:$0xff] %v1004
  %1013 = vst [vmem:[%s7 + $0x18] sm:$0xff] %v1005
  %1014 = vst [vmem:[%s7 + $0x20] sm:$0xff] %v1006
  %1015 = vst [vmem:[%s7 + $0x28] sm:$0xff] %v1007
  %1016 = vst [vmem:[%s7 + $0x30] sm:$0xff] %v1008
  %1017 = vst [vmem:[%s7 + $0x38] sm:$0xff] %v1009
  // Predicated region
  $region34: #{_compute_rnn_impl.1} parent=0 // pred_check
    %p1018 = pneg %p28
  $region35: #{_compute_rnn_impl.1} parent=0 // pred_check_branch
    %1020 = sbr.rel (%p1018) target = $region37
  $region36: #{_compute_rnn_impl.1} parent=0 // pred_region
    %v1021 = vld [vmem:[#allocation2] sm:$0xff]
    %1022 = vst [vmem:[%s8] sm:$0xff] %v1021
  $region37: #{_compute_rnn_impl.1} parent=0 // pred_fallthru
    _
  // Predicated region
  $region38: #{_compute_rnn_impl.1} parent=0 // pred_check
    _
  $region39: #{_compute_rnn_impl.1} parent=0 // pred_check_branch
    %1024 = sbr.rel (0) target = $region41
  $region40: #{_compute_rnn_impl.1} parent=0 // pred_region
    _
  $region41: #{_compute_rnn_impl.1} parent=0 // pred_fallthru
    _
  // Predicated region
  $region42: #{_compute_rnn_impl.1} parent=0 // pred_check
    _
  $region43: #{_compute_rnn_impl.1} parent=0 // pred_check_branch
    %1026 = sbr.rel (0) target = $region45
  $region44: #{_compute_rnn_impl.1} parent=0 // pred_region
    _
  $region45: #{_compute_rnn_impl.1} parent=0 // pred_fallthru
    _
  // Predicated region
  $region46: #{_compute_rnn_impl.1} parent=0 // pred_check
    _
  $region47: #{_compute_rnn_impl.1} parent=0 // pred_check_branch
    %1028 = sbr.rel (0) target = $region49
  $region48: #{_compute_rnn_impl.1} parent=0 // pred_region
    _
  $region49: #{_compute_rnn_impl.1} parent=0 // pred_fallthru
    _
  // Predicated region
  $region50: #{_compute_rnn_impl.1} parent=0 // pred_check
    _
  $region51: #{_compute_rnn_impl.1} parent=0 // pred_check_branch
    %1030 = sbr.rel (0) target = $region53
  $region52: #{_compute_rnn_impl.1} parent=0 // pred_region
    _
  $region53: #{_compute_rnn_impl.1} parent=0 // pred_fallthru
    _

</llo_original>
